<compile_context>
chip_gen: v7x
topology: tpu7x:2x2x1
jax: 0.10.0
libtpu: 0.0.40
codegen_flags: <defaults>
</compile_context>

<pallas_src>
import math
import random

import numpy as np
import jax
import jax.numpy as jnp
from jax import lax
from jax.experimental import pallas as pl
from jax.experimental.pallas import tpu as pltpu


def _round_up(v, m):
    return ((v + m - 1) // m) * m


def _cdiv(a, b):
    return -(-a // b)


# ----------------------------------------------------------------------------
# Host-side parameter sampling (faithful port of RandomResizedCropCustom.get_params,
# including the module's (h_orig, w_orig) -> "width, height = img_shape" unpacking).
# TODO(synk): torch RNG (torch.empty().uniform_ / torch.randint) has no Pallas
# equivalent; sampling uses host-side Python `random`, deterministic per seed
# but not bit-identical to the torch RNG stream.
# ----------------------------------------------------------------------------
def get_params(img_shape, scale, ratio, rng):
    width, height = img_shape
    area = height * width
    log_ratio = (math.log(ratio[0]), math.log(ratio[1]))
    for _ in range(10):
        target_area = area * rng.uniform(scale[0], scale[1])
        aspect_ratio = math.exp(rng.uniform(log_ratio[0], log_ratio[1]))
        w = int(round(math.sqrt(target_area * aspect_ratio)))
        h = int(round(math.sqrt(target_area / aspect_ratio)))
        if 0 < w <= width and 0 < h <= height:
            i = rng.randint(0, height - h)   # inclusive == torch.randint(0, hi + 1)
            j = rng.randint(0, width - w)
            return i, j, h, w
    # fallback: center crop
    in_ratio = float(width) / float(height)
    if in_ratio < min(ratio):
        w = width
        h = int(round(w / min(ratio)))
    elif in_ratio > max(ratio):
        h = height
        w = int(round(h * max(ratio)))
    else:
        w = width
        h = height
    i = (height - h) // 2
    j = (width - w) // 2
    return i, j, h, w


def bilinear_weight_matrix(crop_start, crop_len, in_size, out_size, out_pad=None):
    """[out_pad, in_size] matrix: crop [crop_start, crop_start+crop_len) then
    bilinear-resize to out_size (align_corners=False, torch F.interpolate).
    Source pixels outside the image contribute zero (torchvision crop padding);
    rows >= out_size are zero padding."""
    if out_pad is None:
        out_pad = out_size
    Wm = np.zeros((out_pad, in_size), dtype=np.float32)
    scale = crop_len / out_size
    for o in range(out_size):
        src = (o + 0.5) * scale - 0.5
        if src < 0.0:
            src = 0.0
        i0 = int(math.floor(src))
        i1 = min(i0 + 1, crop_len - 1)
        lam1 = src - i0
        lam0 = 1.0 - lam1
        for idx, lam in ((i0, lam0), (i1, lam1)):
            p = crop_start + idx
            if 0 <= p < in_size:           # outside image -> zero (crop padding)
                Wm[o, p] += lam
    return Wm


# ----------------------------------------------------------------------------
# Pallas kernel: one (batch, frame-group) per grid step, streaming per frame.
# ----------------------------------------------------------------------------
def _resize_kernel(wy_ref, wxt_ref, x_ref, o_ref):
    # wy_ref  : (1, out_hp, H)            bf16  per-batch row weights
    # wxt_ref : (1, W, out_wp)            bf16  per-batch col weights (pre-T)
    # x_ref   : (1, tf, c, H, W)          f32   frame group (cast in-kernel)
    # o_ref   : (1, tf, c, out_h, out_w)  f32   unpadded output block
    _, tf, c, H, W = x_ref.shape
    out_h = o_ref.shape[3]
    out_w = o_ref.shape[4]
    out_wp = wxt_ref.shape[2]

    wy = wy_ref[0]                          # (out_hp, H)  bf16
    wxt = wxt_ref[0]                        # (W, out_wp)  bf16

    # Merging (c, H) -> c*H is a free reshape only when H is f32-sublane
    # aligned; otherwise do the W contraction per channel (avoids a hidden
    # whole-block VMEM relayout copy).
    merge_ch = (H % 8 == 0)

    def frame_body(f, carry):
        if merge_ch:
            # (1) W contraction, all channels in one MXU matmul.
            img2 = x_ref[0, f].reshape(c * H, W).astype(jnp.bfloat16)   # (c*H, W)
            t1 = jnp.dot(img2, wxt,
                         preferred_element_type=jnp.float32)            # (c*H, out_wp)
            t1 = t1.reshape(c, H, out_wp).astype(jnp.bfloat16)
        else:
            t1 = None
        # (2) H contraction per channel; store valid slice directly.
        for ch in range(c):
            if merge_ch:
                t1c = t1[ch]                                             # (H, out_wp)
            else:
                imgc = x_ref[0, f, ch].astype(jnp.bfloat16)              # (H, W)
                t1c = jnp.dot(imgc, wxt,
                              preferred_element_type=jnp.float32
                              ).astype(jnp.bfloat16)                     # (H, out_wp)
            oc = jnp.dot(wy, t1c,
                         preferred_element_type=jnp.float32)             # (out_hp, out_wp)
            o_ref[0, f, ch] = oc[:out_h, :out_w].astype(o_ref.dtype)
        return carry

    lax.fori_loop(0, tf, frame_body, 0, unroll=(tf <= 8))


# ----------------------------------------------------------------------------
# Per-generation VMEM budget + frame-group (Tf) selection.
# ----------------------------------------------------------------------------
def _vmem_budget():
    cap = 64 * 1024 * 1024
    try:
        info = pltpu.get_tpu_info()
        val = getattr(info, "vmem_capacity_bytes", None)
        if val:
            cap = int(val)
    except Exception:
        pass
    if cap >= 128 * 1024 * 1024:            # v5e / v6e
        return 96 * 1024 * 1024, 72 * 1024 * 1024
    return 48 * 1024 * 1024, 36 * 1024 * 1024   # v7x (64 MiB) / fallback


def _pick_frames_per_block(b, t, c, H, W, out_h, out_w, out_hp, out_wp, budget):
    # Pipelined (double-buffered) per-frame block traffic: f32 input + f32 output.
    per_frame = 2 * c * H * W * 4 + 2 * c * out_h * out_w * 4
    # Roughly constant overhead: double-buffered bf16 weights + the streaming
    # loop's per-iteration live intermediates (only one frame's worth is live).
    fixed = (2 * (out_hp * H + W * out_wp) * 2      # weights (bf16, x2 buffers)
             + c * H * W * 2                         # bf16 frame copy
             + c * H * out_wp * 6                    # t1 f32 + bf16
             + out_hp * out_wp * 4)                  # per-channel f32 result
    tf = max(1, min(t, (budget - fixed) // max(per_frame, 1)))
    # Keep at least 2 parallel grid steps when possible (v7x has 2 TCs).
    if b * _cdiv(t, tf) < 2 and t >= 2:
        tf = _cdiv(t, 2)
    return int(tf)


def random_resized_crop(x, size, scale=(0.08, 1.0), ratio=(3.0 / 4.0, 4.0 / 3.0),
                        seed=0):
    """x: [b, t, c, H, W] float -> [b, t, c, size[0], size[1]] float32."""
    x = jnp.asarray(x)
    b, t, c, H, W = x.shape
    out_h, out_w = int(size[0]), int(size[1])
    out_hp = _round_up(out_h, 8)       # padded weight rows (kernel-internal only)
    out_wp = _round_up(out_w, 128)     # lane-dense intermediates (kernel-internal)

    # Per-batch separable crop+resize weights (zero rows/cols as padding).
    rng = random.Random(seed)
    wy_np = np.zeros((b, out_hp, H), dtype=np.float32)
    wxt_np = np.zeros((b, W, out_wp), dtype=np.float32)
    for bi in range(b):
        i, j, h, w = get_params((H, W), scale, ratio, rng)
        wy_np[bi] = bilinear_weight_matrix(i, h, H, out_h, out_hp)        # rows
        wxt_np[bi] = bilinear_weight_matrix(j, w, W, out_w, out_wp).T     # cols^T

    wy = jnp.asarray(wy_np, dtype=jnp.bfloat16)
    wxt = jnp.asarray(wxt_np, dtype=jnp.bfloat16)

    vmem_limit, block_budget = _vmem_budget()
    tf = _pick_frames_per_block(b, t, c, H, W, out_h, out_w, out_hp, out_wp,
                                block_budget)
    nt = _cdiv(t, tf)
    grid = (b, nt)

    flops = 2 * b * t * c * (H * W * out_wp + out_hp * H * out_wp)
    bytes_accessed = (b * t * c * H * W * int(x.dtype.itemsize)
                      + b * t * c * out_h * out_w * 4
                      + int(wy.size) * 2 + int(wxt.size) * 2)

    out = pl.pallas_call(
        _resize_kernel,
        out_shape=jax.ShapeDtypeStruct((b, t, c, out_h, out_w), jnp.float32),
        grid=grid,
        in_specs=[
            # Weights: same block for every frame-group -> no re-DMA along ti.
            pl.BlockSpec((1, out_hp, H), lambda bi, ti: (bi, 0, 0)),
            pl.BlockSpec((1, W, out_wp), lambda bi, ti: (bi, 0, 0)),
            # Raw f32 input, cast to bf16 inside the kernel (no wrapper cast).
            pl.BlockSpec((1, tf, c, H, W), lambda bi, ti: (bi, ti, 0, 0, 0)),
        ],
        out_specs=pl.BlockSpec((1, tf, c, out_h, out_w),
                               lambda bi, ti: (bi, ti, 0, 0, 0)),
        compiler_params=pltpu.CompilerParams(
            dimension_semantics=("parallel", "parallel"),
            vmem_limit_bytes=vmem_limit),
        cost_estimate=pl.CostEstimate(flops=int(flops), transcendentals=0,
                                      bytes_accessed=int(bytes_accessed)),
    )(wy, wxt, x)
    return out


if __name__ == "__main__":
    b, t, c, H, W = 2, 3, 4, 16, 16
    size = (8, 8)
    seed = 0

    key = jax.random.PRNGKey(0)
    x = jax.random.normal(key, (b, t, c, H, W), dtype=jnp.float32)

    out = random_resized_crop(x, size, seed=seed)
    out = jax.block_until_ready(out)
    assert out.shape == (b, t, c, size[0], size[1])
    assert out.dtype == jnp.float32

    # Independent pure-JAX reference (same crop params via same seed), computed
    # from the same bf16-rounded inputs/weights the kernel uses (f32 accumulate).
    rng = random.Random(seed)
    wy_np = np.zeros((b, size[0], H), dtype=np.float32)
    wx_np = np.zeros((b, size[1], W), dtype=np.float32)
    for bi in range(b):
        i, j, h, w = get_params((H, W), (0.08, 1.0), (3.0 / 4.0, 4.0 / 3.0), rng)
        wy_np[bi] = bilinear_weight_matrix(i, h, H, size[0])
        wx_np[bi] = bilinear_weight_matrix(j, w, W, size[1])
    x_b = x.astype(jnp.bfloat16).astype(jnp.float32)
    wy_b = jnp.asarray(wy_np).astype(jnp.bfloat16).astype(jnp.float32)
    wx_b = jnp.asarray(wx_np).astype(jnp.bfloat16).astype(jnp.float32)
    ref = jnp.einsum('byh,btchw,bxw->btcyx', wy_b, x_b, wx_b)

    np.testing.assert_allclose(np.asarray(out), np.asarray(ref),
                               rtol=3e-2, atol=3e-2)
    print("KERNEL_OK")
</pallas_src>

<mosaic_0001>
module attributes {stable_mosaic.version = 11 : i64} {
  func.func @_resize_kernel(%arg0: i32, %arg1: i32, %arg2: memref<1x8x16xbf16, #tpu.memory_space<vmem>>, %arg3: memref<1x16x128xbf16, #tpu.memory_space<vmem>>, %arg4: memref<1x3x4x16x16xf32, #tpu.memory_space<vmem>>, %arg5: memref<1x3x4x8x8xf32, #tpu.memory_space<vmem>>) attributes {dimension_semantics = [#tpu.dimension_semantics<parallel>, #tpu.dimension_semantics<parallel>], iteration_bounds = array<i64: 2, 1>, scalar_prefetch = 0 : i64, scratch_operands = 0 : i64, tpu.core_type = #tpu.core_type<tc>, window_params = [{transform_indices = @transform_0, window_bounds = array<i64: 1, 8, 16>}, {transform_indices = @transform_1, window_bounds = array<i64: 1, 16, 128>}, {transform_indices = @transform_2, window_bounds = array<i64: 1, 3, 4, 16, 16>}, {transform_indices = @transform_3, window_bounds = array<i64: 1, 3, 4, 8, 8>}]} {
    %c0 = arith.constant 0 : index
    %c0_0 = arith.constant 0 : index
    %c0_1 = arith.constant 0 : index
    %0 = vector.load %arg2[%c0, %c0_0, %c0_1] : memref<1x8x16xbf16, #tpu.memory_space<vmem>>, vector<1x8x16xbf16>
    %1 = vector.shape_cast %0 : vector<1x8x16xbf16> to vector<8x16xbf16>
    %c0_2 = arith.constant 0 : index
    %c0_3 = arith.constant 0 : index
    %c0_4 = arith.constant 0 : index
    %2 = vector.load %arg3[%c0_2, %c0_3, %c0_4] : memref<1x16x128xbf16, #tpu.memory_space<vmem>>, vector<1x16x128xbf16>
    %3 = vector.shape_cast %2 : vector<1x16x128xbf16> to vector<16x128xbf16>
    %c0_i32 = arith.constant 0 : i32
    %c0_5 = arith.constant 0 : index
    %4 = arith.index_cast %c0_i32 : i32 to index
    %c0_6 = arith.constant 0 : index
    %c0_7 = arith.constant 0 : index
    %c0_8 = arith.constant 0 : index
    %5 = vector.load %arg4[%c0_5, %4, %c0_6, %c0_7, %c0_8] : memref<1x3x4x16x16xf32, #tpu.memory_space<vmem>>, vector<1x1x4x16x16xf32>
    %6 = vector.shape_cast %5 : vector<1x1x4x16x16xf32> to vector<4x16x16xf32>
    %7 = vector.shape_cast %6 : vector<4x16x16xf32> to vector<64x16xf32>
    %8 = arith.truncf %7 : vector<64x16xf32> to vector<64x16xbf16>
    %cst = arith.constant dense<0.000000e+00> : vector<64x128xf32>
    %9 = tpu.matmul %8, %3, %cst {dimension_numbers = #tpu.dot_dimension_numbers<[1], [0], [0], [1], [0, 0, 1, 1], [], []>} : vector<64x16xbf16>, vector<16x128xbf16>, vector<64x128xf32> -> vector<64x128xf32>
    %10 = vector.shape_cast %9 : vector<64x128xf32> to vector<4x16x128xf32>
    %11 = arith.truncf %10 : vector<4x16x128xf32> to vector<4x16x128xbf16>
    %12 = vector.extract_strided_slice %11 {offsets = [0, 0, 0], sizes = [1, 16, 128], strides = [1, 1, 1]} : vector<4x16x128xbf16> to vector<1x16x128xbf16>
    %13 = vector.shape_cast %12 : vector<1x16x128xbf16> to vector<16x128xbf16>
    %cst_9 = arith.constant dense<0.000000e+00> : vector<8x128xf32>
    %14 = tpu.matmul %1, %13, %cst_9 {dimension_numbers = #tpu.dot_dimension_numbers<[1], [0], [0], [1], [0, 0, 1, 1], [], []>} : vector<8x16xbf16>, vector<16x128xbf16>, vector<8x128xf32> -> vector<8x128xf32>
    %15 = vector.extract_strided_slice %14 {offsets = [0, 0], sizes = [8, 8], strides = [1, 1]} : vector<8x128xf32> to vector<8x8xf32>
    %c0_10 = arith.constant 0 : index
    %16 = arith.index_cast %c0_i32 : i32 to index
    %c0_11 = arith.constant 0 : index
    %c0_12 = arith.constant 0 : index
    %c0_13 = arith.constant 0 : index
    %17 = vector.load %arg5[%c0_10, %16, %c0_11, %c0_12, %c0_13] : memref<1x3x4x8x8xf32, #tpu.memory_space<vmem>>, vector<1x1x1x8x8xf32>
    %18 = vector.shape_cast %17 : vector<1x1x1x8x8xf32> to vector<8x8xf32>
    %19 = vector.shape_cast %15 : vector<8x8xf32> to vector<1x1x1x8x8xf32>
    tpu.vector_store %arg5[%c0_10, %16, %c0_11, %c0_12, %c0_13], %19 {strides = array<i32>} : memref<1x3x4x8x8xf32, #tpu.memory_space<vmem>>, vector<1x1x1x8x8xf32>,
    %20 = vector.extract_strided_slice %11 {offsets = [1, 0, 0], sizes = [1, 16, 128], strides = [1, 1, 1]} : vector<4x16x128xbf16> to vector<1x16x128xbf16>
    %21 = vector.shape_cast %20 : vector<1x16x128xbf16> to vector<16x128xbf16>
    %cst_14 = arith.constant dense<0.000000e+00> : vector<8x128xf32>
    %22 = tpu.matmul %1, %21, %cst_14 {dimension_numbers = #tpu.dot_dimension_numbers<[1], [0], [0], [1], [0, 0, 1, 1], [], []>} : vector<8x16xbf16>, vector<16x128xbf16>, vector<8x128xf32> -> vector<8x128xf32>
    %23 = vector.extract_strided_slice %22 {offsets = [0, 0], sizes = [8, 8], strides = [1, 1]} : vector<8x128xf32> to vector<8x8xf32>
    %c0_15 = arith.constant 0 : index
    %24 = arith.index_cast %c0_i32 : i32 to index
    %c1 = arith.constant 1 : index
    %c0_16 = arith.constant 0 : index
    %c0_17 = arith.constant 0 : index
    %25 = vector.load %arg5[%c0_15, %24, %c1, %c0_16, %c0_17] : memref<1x3x4x8x8xf32, #tpu.memory_space<vmem>>, vector<1x1x1x8x8xf32>
    %26 = vector.shape_cast %25 : vector<1x1x1x8x8xf32> to vector<8x8xf32>
    %27 = vector.shape_cast %23 : vector<8x8xf32> to vector<1x1x1x8x8xf32>
    tpu.vector_store %arg5[%c0_15, %24, %c1, %c0_16, %c0_17], %27 {strides = array<i32>} : memref<1x3x4x8x8xf32, #tpu.memory_space<vmem>>, vector<1x1x1x8x8xf32>,
    %28 = vector.extract_strided_slice %11 {offsets = [2, 0, 0], sizes = [1, 16, 128], strides = [1, 1, 1]} : vector<4x16x128xbf16> to vector<1x16x128xbf16>
    %29 = vector.shape_cast %28 : vector<1x16x128xbf16> to vector<16x128xbf16>
    %cst_18 = arith.constant dense<0.000000e+00> : vector<8x128xf32>
    %30 = tpu.matmul %1, %29, %cst_18 {dimension_numbers = #tpu.dot_dimension_numbers<[1], [0], [0], [1], [0, 0, 1, 1], [], []>} : vector<8x16xbf16>, vector<16x128xbf16>, vector<8x128xf32> -> vector<8x128xf32>
    %31 = vector.extract_strided_slice %30 {offsets = [0, 0], sizes = [8, 8], strides = [1, 1]} : vector<8x128xf32> to vector<8x8xf32>
    %c0_19 = arith.constant 0 : index
    %32 = arith.index_cast %c0_i32 : i32 to index
    %c2 = arith.constant 2 : index
    %c0_20 = arith.constant 0 : index
    %c0_21 = arith.constant 0 : index
    %33 = vector.load %arg5[%c0_19, %32, %c2, %c0_20, %c0_21] : memref<1x3x4x8x8xf32, #tpu.memory_space<vmem>>, vector<1x1x1x8x8xf32>
    %34 = vector.shape_cast %33 : vector<1x1x1x8x8xf32> to vector<8x8xf32>
    %35 = vector.shape_cast %31 : vector<8x8xf32> to vector<1x1x1x8x8xf32>
    tpu.vector_store %arg5[%c0_19, %32, %c2, %c0_20, %c0_21], %35 {strides = array<i32>} : memref<1x3x4x8x8xf32, #tpu.memory_space<vmem>>, vector<1x1x1x8x8xf32>,
    %36 = vector.extract_strided_slice %11 {offsets = [3, 0, 0], sizes = [1, 16, 128], strides = [1, 1, 1]} : vector<4x16x128xbf16> to vector<1x16x128xbf16>
    %37 = vector.shape_cast %36 : vector<1x16x128xbf16> to vector<16x128xbf16>
    %cst_22 = arith.constant dense<0.000000e+00> : vector<8x128xf32>
    %38 = tpu.matmul %1, %37, %cst_22 {dimension_numbers = #tpu.dot_dimension_numbers<[1], [0], [0], [1], [0, 0, 1, 1], [], []>} : vector<8x16xbf16>, vector<16x128xbf16>, vector<8x128xf32> -> vector<8x128xf32>
    %39 = vector.extract_strided_slice %38 {offsets = [0, 0], sizes = [8, 8], strides = [1, 1]} : vector<8x128xf32> to vector<8x8xf32>
    %c0_23 = arith.constant 0 : index
    %40 = arith.index_cast %c0_i32 : i32 to index
    %c3 = arith.constant 3 : index
    %c0_24 = arith.constant 0 : index
    %c0_25 = arith.constant 0 : index
    %41 = vector.load %arg5[%c0_23, %40, %c3, %c0_24, %c0_25] : memref<1x3x4x8x8xf32, #tpu.memory_space<vmem>>, vector<1x1x1x8x8xf32>
    %42 = vector.shape_cast %41 : vector<1x1x1x8x8xf32> to vector<8x8xf32>
    %43 = vector.shape_cast %39 : vector<8x8xf32> to vector<1x1x1x8x8xf32>
    tpu.vector_store %arg5[%c0_23, %40, %c3, %c0_24, %c0_25], %43 {strides = array<i32>} : memref<1x3x4x8x8xf32, #tpu.memory_space<vmem>>, vector<1x1x1x8x8xf32>,
    %c1_i32 = arith.constant 1 : i32
    %c0_26 = arith.constant 0 : index
    %44 = arith.index_cast %c1_i32 : i32 to index
    %c0_27 = arith.constant 0 : index
    %c0_28 = arith.constant 0 : index
    %c0_29 = arith.constant 0 : index
    %45 = vector.load %arg4[%c0_26, %44, %c0_27, %c0_28, %c0_29] : memref<1x3x4x16x16xf32, #tpu.memory_space<vmem>>, vector<1x1x4x16x16xf32>
    %46 = vector.shape_cast %45 : vector<1x1x4x16x16xf32> to vector<4x16x16xf32>
    %47 = vector.shape_cast %46 : vector<4x16x16xf32> to vector<64x16xf32>
    %48 = arith.truncf %47 : vector<64x16xf32> to vector<64x16xbf16>
    %cst_30 = arith.constant dense<0.000000e+00> : vector<64x128xf32>
    %49 = tpu.matmul %48, %3, %cst_30 {dimension_numbers = #tpu.dot_dimension_numbers<[1], [0], [0], [1], [0, 0, 1, 1], [], []>} : vector<64x16xbf16>, vector<16x128xbf16>, vector<64x128xf32> -> vector<64x128xf32>
    %50 = vector.shape_cast %49 : vector<64x128xf32> to vector<4x16x128xf32>
    %51 = arith.truncf %50 : vector<4x16x128xf32> to vector<4x16x128xbf16>
    %52 = vector.extract_strided_slice %51 {offsets = [0, 0, 0], sizes = [1, 16, 128], strides = [1, 1, 1]} : vector<4x16x128xbf16> to vector<1x16x128xbf16>
    %53 = vector.shape_cast %52 : vector<1x16x128xbf16> to vector<16x128xbf16>
    %cst_31 = arith.constant dense<0.000000e+00> : vector<8x128xf32>
    %54 = tpu.matmul %1, %53, %cst_31 {dimension_numbers = #tpu.dot_dimension_numbers<[1], [0], [0], [1], [0, 0, 1, 1], [], []>} : vector<8x16xbf16>, vector<16x128xbf16>, vector<8x128xf32> -> vector<8x128xf32>
    %55 = vector.extract_strided_slice %54 {offsets = [0, 0], sizes = [8, 8], strides = [1, 1]} : vector<8x128xf32> to vector<8x8xf32>
    %c0_32 = arith.constant 0 : index
    %56 = arith.index_cast %c1_i32 : i32 to index
    %c0_33 = arith.constant 0 : index
    %c0_34 = arith.constant 0 : index
    %c0_35 = arith.constant 0 : index
    %57 = vector.load %arg5[%c0_32, %56, %c0_33, %c0_34, %c0_35] : memref<1x3x4x8x8xf32, #tpu.memory_space<vmem>>, vector<1x1x1x8x8xf32>
    %58 = vector.shape_cast %57 : vector<1x1x1x8x8xf32> to vector<8x8xf32>
    %59 = vector.shape_cast %55 : vector<8x8xf32> to vector<1x1x1x8x8xf32>
    tpu.vector_store %arg5[%c0_32, %56, %c0_33, %c0_34, %c0_35], %59 {strides = array<i32>} : memref<1x3x4x8x8xf32, #tpu.memory_space<vmem>>, vector<1x1x1x8x8xf32>,
    %60 = vector.extract_strided_slice %51 {offsets = [1, 0, 0], sizes = [1, 16, 128], strides = [1, 1, 1]} : vector<4x16x128xbf16> to vector<1x16x128xbf16>
    %61 = vector.shape_cast %60 : vector<1x16x128xbf16> to vector<16x128xbf16>
    %cst_36 = arith.constant dense<0.000000e+00> : vector<8x128xf32>
    %62 = tpu.matmul %1, %61, %cst_36 {dimension_numbers = #tpu.dot_dimension_numbers<[1], [0], [0], [1], [0, 0, 1, 1], [], []>} : vector<8x16xbf16>, vector<16x128xbf16>, vector<8x128xf32> -> vector<8x128xf32>
    %63 = vector.extract_strided_slice %62 {offsets = [0, 0], sizes = [8, 8], strides = [1, 1]} : vector<8x128xf32> to vector<8x8xf32>
    %c0_37 = arith.constant 0 : index
    %64 = arith.index_cast %c1_i32 : i32 to index
    %c1_38 = arith.constant 1 : index
    %c0_39 = arith.constant 0 : index
    %c0_40 = arith.constant 0 : index
    %65 = vector.load %arg5[%c0_37, %64, %c1_38, %c0_39, %c0_40] : memref<1x3x4x8x8xf32, #tpu.memory_space<vmem>>, vector<1x1x1x8x8xf32>
    %66 = vector.shape_cast %65 : vector<1x1x1x8x8xf32> to vector<8x8xf32>
    %67 = vector.shape_cast %63 : vector<8x8xf32> to vector<1x1x1x8x8xf32>
    tpu.vector_store %arg5[%c0_37, %64, %c1_38, %c0_39, %c0_40], %67 {strides = array<i32>} : memref<1x3x4x8x8xf32, #tpu.memory_space<vmem>>, vector<1x1x1x8x8xf32>,
    %68 = vector.extract_strided_slice %51 {offsets = [2, 0, 0], sizes = [1, 16, 128], strides = [1, 1, 1]} : vector<4x16x128xbf16> to vector<1x16x128xbf16>
    %69 = vector.shape_cast %68 : vector<1x16x128xbf16> to vector<16x128xbf16>
    %cst_41 = arith.constant dense<0.000000e+00> : vector<8x128xf32>
    %70 = tpu.matmul %1, %69, %cst_41 {dimension_numbers = #tpu.dot_dimension_numbers<[1], [0], [0], [1], [0, 0, 1, 1], [], []>} : vector<8x16xbf16>, vector<16x128xbf16>, vector<8x128xf32> -> vector<8x128xf32>
    %71 = vector.extract_strided_slice %70 {offsets = [0, 0], sizes = [8, 8], strides = [1, 1]} : vector<8x128xf32> to vector<8x8xf32>
    %c0_42 = arith.constant 0 : index
    %72 = arith.index_cast %c1_i32 : i32 to index
    %c2_43 = arith.constant 2 : index
    %c0_44 = arith.constant 0 : index
    %c0_45 = arith.constant 0 : index
    %73 = vector.load %arg5[%c0_42, %72, %c2_43, %c0_44, %c0_45] : memref<1x3x4x8x8xf32, #tpu.memory_space<vmem>>, vector<1x1x1x8x8xf32>
    %74 = vector.shape_cast %73 : vector<1x1x1x8x8xf32> to vector<8x8xf32>
    %75 = vector.shape_cast %71 : vector<8x8xf32> to vector<1x1x1x8x8xf32>
    tpu.vector_store %arg5[%c0_42, %72, %c2_43, %c0_44, %c0_45], %75 {strides = array<i32>} : memref<1x3x4x8x8xf32, #tpu.memory_space<vmem>>, vector<1x1x1x8x8xf32>,
    %76 = vector.extract_strided_slice %51 {offsets = [3, 0, 0], sizes = [1, 16, 128], strides = [1, 1, 1]} : vector<4x16x128xbf16> to vector<1x16x128xbf16>
    %77 = vector.shape_cast %76 : vector<1x16x128xbf16> to vector<16x128xbf16>
    %cst_46 = arith.constant dense<0.000000e+00> : vector<8x128xf32>
    %78 = tpu.matmul %1, %77, %cst_46 {dimension_numbers = #tpu.dot_dimension_numbers<[1], [0], [0], [1], [0, 0, 1, 1], [], []>} : vector<8x16xbf16>, vector<16x128xbf16>, vector<8x128xf32> -> vector<8x128xf32>
    %79 = vector.extract_strided_slice %78 {offsets = [0, 0], sizes = [8, 8], strides = [1, 1]} : vector<8x128xf32> to vector<8x8xf32>
    %c0_47 = arith.constant 0 : index
    %80 = arith.index_cast %c1_i32 : i32 to index
    %c3_48 = arith.constant 3 : index
    %c0_49 = arith.constant 0 : index
    %c0_50 = arith.constant 0 : index
    %81 = vector.load %arg5[%c0_47, %80, %c3_48, %c0_49, %c0_50] : memref<1x3x4x8x8xf32, #tpu.memory_space<vmem>>, vector<1x1x1x8x8xf32>
    %82 = vector.shape_cast %81 : vector<1x1x1x8x8xf32> to vector<8x8xf32>
    %83 = vector.shape_cast %79 : vector<8x8xf32> to vector<1x1x1x8x8xf32>
    tpu.vector_store %arg5[%c0_47, %80, %c3_48, %c0_49, %c0_50], %83 {strides = array<i32>} : memref<1x3x4x8x8xf32, #tpu.memory_space<vmem>>, vector<1x1x1x8x8xf32>,
    %c2_i32 = arith.constant 2 : i32
    %c0_51 = arith.constant 0 : index
    %84 = arith.index_cast %c2_i32 : i32 to index
    %c0_52 = arith.constant 0 : index
    %c0_53 = arith.constant 0 : index
    %c0_54 = arith.constant 0 : index
    %85 = vector.load %arg4[%c0_51, %84, %c0_52, %c0_53, %c0_54] : memref<1x3x4x16x16xf32, #tpu.memory_space<vmem>>, vector<1x1x4x16x16xf32>
    %86 = vector.shape_cast %85 : vector<1x1x4x16x16xf32> to vector<4x16x16xf32>
    %87 = vector.shape_cast %86 : vector<4x16x16xf32> to vector<64x16xf32>
    %88 = arith.truncf %87 : vector<64x16xf32> to vector<64x16xbf16>
    %cst_55 = arith.constant dense<0.000000e+00> : vector<64x128xf32>
    %89 = tpu.matmul %88, %3, %cst_55 {dimension_numbers = #tpu.dot_dimension_numbers<[1], [0], [0], [1], [0, 0, 1, 1], [], []>} : vector<64x16xbf16>, vector<16x128xbf16>, vector<64x128xf32> -> vector<64x128xf32>
    %90 = vector.shape_cast %89 : vector<64x128xf32> to vector<4x16x128xf32>
    %91 = arith.truncf %90 : vector<4x16x128xf32> to vector<4x16x128xbf16>
    %92 = vector.extract_strided_slice %91 {offsets = [0, 0, 0], sizes = [1, 16, 128], strides = [1, 1, 1]} : vector<4x16x128xbf16> to vector<1x16x128xbf16>
    %93 = vector.shape_cast %92 : vector<1x16x128xbf16> to vector<16x128xbf16>
    %cst_56 = arith.constant dense<0.000000e+00> : vector<8x128xf32>
    %94 = tpu.matmul %1, %93, %cst_56 {dimension_numbers = #tpu.dot_dimension_numbers<[1], [0], [0], [1], [0, 0, 1, 1], [], []>} : vector<8x16xbf16>, vector<16x128xbf16>, vector<8x128xf32> -> vector<8x128xf32>
    %95 = vector.extract_strided_slice %94 {offsets = [0, 0], sizes = [8, 8], strides = [1, 1]} : vector<8x128xf32> to vector<8x8xf32>
    %c0_57 = arith.constant 0 : index
    %96 = arith.index_cast %c2_i32 : i32 to index
    %c0_58 = arith.constant 0 : index
    %c0_59 = arith.constant 0 : index
    %c0_60 = arith.constant 0 : index
    %97 = vector.load %arg5[%c0_57, %96, %c0_58, %c0_59, %c0_60] : memref<1x3x4x8x8xf32, #tpu.memory_space<vmem>>, vector<1x1x1x8x8xf32>
    %98 = vector.shape_cast %97 : vector<1x1x1x8x8xf32> to vector<8x8xf32>
    %99 = vector.shape_cast %95 : vector<8x8xf32> to vector<1x1x1x8x8xf32>
    tpu.vector_store %arg5[%c0_57, %96, %c0_58, %c0_59, %c0_60], %99 {strides = array<i32>} : memref<1x3x4x8x8xf32, #tpu.memory_space<vmem>>, vector<1x1x1x8x8xf32>,
    %100 = vector.extract_strided_slice %91 {offsets = [1, 0, 0], sizes = [1, 16, 128], strides = [1, 1, 1]} : vector<4x16x128xbf16> to vector<1x16x128xbf16>
    %101 = vector.shape_cast %100 : vector<1x16x128xbf16> to vector<16x128xbf16>
    %cst_61 = arith.constant dense<0.000000e+00> : vector<8x128xf32>
    %102 = tpu.matmul %1, %101, %cst_61 {dimension_numbers = #tpu.dot_dimension_numbers<[1], [0], [0], [1], [0, 0, 1, 1], [], []>} : vector<8x16xbf16>, vector<16x128xbf16>, vector<8x128xf32> -> vector<8x128xf32>
    %103 = vector.extract_strided_slice %102 {offsets = [0, 0], sizes = [8, 8], strides = [1, 1]} : vector<8x128xf32> to vector<8x8xf32>
    %c0_62 = arith.constant 0 : index
    %104 = arith.index_cast %c2_i32 : i32 to index
    %c1_63 = arith.constant 1 : index
    %c0_64 = arith.constant 0 : index
    %c0_65 = arith.constant 0 : index
    %105 = vector.load %arg5[%c0_62, %104, %c1_63, %c0_64, %c0_65] : memref<1x3x4x8x8xf32, #tpu.memory_space<vmem>>, vector<1x1x1x8x8xf32>
    %106 = vector.shape_cast %105 : vector<1x1x1x8x8xf32> to vector<8x8xf32>
    %107 = vector.shape_cast %103 : vector<8x8xf32> to vector<1x1x1x8x8xf32>
    tpu.vector_store %arg5[%c0_62, %104, %c1_63, %c0_64, %c0_65], %107 {strides = array<i32>} : memref<1x3x4x8x8xf32, #tpu.memory_space<vmem>>, vector<1x1x1x8x8xf32>,
    %108 = vector.extract_strided_slice %91 {offsets = [2, 0, 0], sizes = [1, 16, 128], strides = [1, 1, 1]} : vector<4x16x128xbf16> to vector<1x16x128xbf16>
    %109 = vector.shape_cast %108 : vector<1x16x128xbf16> to vector<16x128xbf16>
    %cst_66 = arith.constant dense<0.000000e+00> : vector<8x128xf32>
    %110 = tpu.matmul %1, %109, %cst_66 {dimension_numbers = #tpu.dot_dimension_numbers<[1], [0], [0], [1], [0, 0, 1, 1], [], []>} : vector<8x16xbf16>, vector<16x128xbf16>, vector<8x128xf32> -> vector<8x128xf32>
    %111 = vector.extract_strided_slice %110 {offsets = [0, 0], sizes = [8, 8], strides = [1, 1]} : vector<8x128xf32> to vector<8x8xf32>
    %c0_67 = arith.constant 0 : index
    %112 = arith.index_cast %c2_i32 : i32 to index
    %c2_68 = arith.constant 2 : index
    %c0_69 = arith.constant 0 : index
    %c0_70 = arith.constant 0 : index
    %113 = vector.load %arg5[%c0_67, %112, %c2_68, %c0_69, %c0_70] : memref<1x3x4x8x8xf32, #tpu.memory_space<vmem>>, vector<1x1x1x8x8xf32>
    %114 = vector.shape_cast %113 : vector<1x1x1x8x8xf32> to vector<8x8xf32>
    %115 = vector.shape_cast %111 : vector<8x8xf32> to vector<1x1x1x8x8xf32>
    tpu.vector_store %arg5[%c0_67, %112, %c2_68, %c0_69, %c0_70], %115 {strides = array<i32>} : memref<1x3x4x8x8xf32, #tpu.memory_space<vmem>>, vector<1x1x1x8x8xf32>,
    %116 = vector.extract_strided_slice %91 {offsets = [3, 0, 0], sizes = [1, 16, 128], strides = [1, 1, 1]} : vector<4x16x128xbf16> to vector<1x16x128xbf16>
    %117 = vector.shape_cast %116 : vector<1x16x128xbf16> to vector<16x128xbf16>
    %cst_71 = arith.constant dense<0.000000e+00> : vector<8x128xf32>
    %118 = tpu.matmul %1, %117, %cst_71 {dimension_numbers = #tpu.dot_dimension_numbers<[1], [0], [0], [1], [0, 0, 1, 1], [], []>} : vector<8x16xbf16>, vector<16x128xbf16>, vector<8x128xf32> -> vector<8x128xf32>
    %119 = vector.extract_strided_slice %118 {offsets = [0, 0], sizes = [8, 8], strides = [1, 1]} : vector<8x128xf32> to vector<8x8xf32>
    %c0_72 = arith.constant 0 : index
    %120 = arith.index_cast %c2_i32 : i32 to index
    %c3_73 = arith.constant 3 : index
    %c0_74 = arith.constant 0 : index
    %c0_75 = arith.constant 0 : index
    %121 = vector.load %arg5[%c0_72, %120, %c3_73, %c0_74, %c0_75] : memref<1x3x4x8x8xf32, #tpu.memory_space<vmem>>, vector<1x1x1x8x8xf32>
    %122 = vector.shape_cast %121 : vector<1x1x1x8x8xf32> to vector<8x8xf32>
    %123 = vector.shape_cast %119 : vector<8x8xf32> to vector<1x1x1x8x8xf32>
    tpu.vector_store %arg5[%c0_72, %120, %c3_73, %c0_74, %c0_75], %123 {strides = array<i32>} : memref<1x3x4x8x8xf32, #tpu.memory_space<vmem>>, vector<1x1x1x8x8xf32>,
    %c3_i32 = arith.constant 3 : i32
    return
  }
  func.func @transform_0(%arg0: i32, %arg1: i32) -> (i32, i32, i32) {
    %c0_i32 = arith.constant 0 : i32
    %c0_i32_0 = arith.constant 0 : i32
    %c0_i32_1 = arith.constant 0 : i32
    return %arg0, %c0_i32, %c0_i32_0 : i32, i32, i32
  }
  func.func @transform_1(%arg0: i32, %arg1: i32) -> (i32, i32, i32) {
    %c0_i32 = arith.constant 0 : i32
    %c0_i32_0 = arith.constant 0 : i32
    %c0_i32_1 = arith.constant 0 : i32
    return %arg0, %c0_i32, %c0_i32_0 : i32, i32, i32
  }
  func.func @transform_2(%arg0: i32, %arg1: i32) -> (i32, i32, i32, i32, i32) {
    %c0_i32 = arith.constant 0 : i32
    %c0_i32_0 = arith.constant 0 : i32
    %c0_i32_1 = arith.constant 0 : i32
    %c0_i32_2 = arith.constant 0 : i32
    return %arg0, %arg1, %c0_i32, %c0_i32_0, %c0_i32_1 : i32, i32, i32, i32, i32
  }
  func.func @transform_3(%arg0: i32, %arg1: i32) -> (i32, i32, i32, i32, i32) {
    %c0_i32 = arith.constant 0 : i32
    %c0_i32_0 = arith.constant 0 : i32
    %c0_i32_1 = arith.constant 0 : i32
    %c0_i32_2 = arith.constant 0 : i32
    return %arg0, %arg1, %c0_i32, %c0_i32_0, %c0_i32_1 : i32, i32, i32, i32, i32
  }
}

</mosaic_0001>

<llo_original>
// kernel: tpu_custom_call.1
$region0: #{tpu_custom_call.1}
  #allocation0 [shape = 'u32[]', space=smem, size = 0x4, offset = 0x4, fixed_abs, tag = 'smem constant byte address 0x4 - core index']
  #allocation1 [shape = 'u32[144,128]{1,0:T(1,128)}', space=vmem, size = 0x12000, scoped, tag = 'internal scratch']
  %s0 = inlined_call_operand.hbm [shape: bf16[2,8,16], index: 0, kind: input, shape index: {}]
  %s1 = inlined_call_operand.hbm [shape: bf16[2,16,128], index: 1, kind: input, shape index: {}]
  %s2 = inlined_call_operand.hbm [shape: f32[2,3,4,16,16], index: 2, kind: input, shape index: {}]
  %s3 = inlined_call_operand.hbm [shape: f32[2,3,4,8,8], index: 3, kind: output, shape index: {}]
  %s4 = sld [smem:[#allocation0]]
  $region57: #{tpu_custom_call.1} parent=0
    _
  %s6 = ssub.s32 1, %s4
  %s7 = scalar_select 0, %s6, %s4
  $region1: #{tpu_custom_call.1} parent=0
    #allocation2 [shape = 'u8[4096]{0}', space=vmem, size = 0x1000, scoped, tag = 'input window, operand 0']
    #allocation3 [shape = 's32[2]{0}', space=sflag, size = 0x8, scoped, tag = 'scoped memory for tpu_custom_call.1']
    #allocation4 [shape = 's32[2]{0}', space=sflag, size = 0x8, scoped, tag = 'scoped memory for tpu_custom_call.1']
    #allocation5 [shape = 'u8[8192]{0}', space=vmem, size = 0x2000, scoped, tag = 'input window, operand 1']
    #allocation6 [shape = 's32[2]{0}', space=sflag, size = 0x8, scoped, tag = 'scoped memory for tpu_custom_call.1']
    #allocation7 [shape = 'u8[196608]{0}', space=vmem, size = 0x30000, scoped, tag = 'input window, operand 2']
    #allocation8 [shape = 'u8[98304]{0}', space=vmem, size = 0x18000, scoped, tag = 'output window, operand 0']
    %8 = vsyncpa [#allocation3], 0
    %s9 = scalar_lea.sflag [#allocation3], 1
    %10 = vsyncpa %s9, 0
    %11 = vsyncpa [#allocation6], 0
    %s12 = scalar_lea.sflag [#allocation6], 1
    %13 = vsyncpa %s12, 0
    %14 = vsyncpa [#allocation4], 0
    %s15 = scalar_lea.sflag [#allocation4], 1
    %16 = vsyncpa %s15, 0
    loop: start=0, step=1, limit=4
    $region2: #{tpu_custom_call.1} parent=1 // loop_pre_header
      _
    $region3: #{tpu_custom_call.1} parent=1 // loop_header
      %s18 = sphi 0, %s22
      %p19 = scmp.ge.s32.totalorder %s18, 4
      %s25 = sphi 0, %s37
      %s26 = sphi 0, %s33
      %s27 = sphi 0, %s25
      %s28 = sphi 0, %s26
      %s29 = sphi 0, %s27
      %s30 = sphi 0, %s28
      %s40 = sphi 0, %s42
      %s43 = sphi 0, %s40
      %s44 = sphi 0, %s43
      %s60 = sphi 0, %s44
      %s66 = sphi 0, %s68
      %s69 = sphi 0, %s66
      %s70 = sphi 0, %s69
      %s86 = sphi 0, %s70
      %s94 = sphi 0, %s96
      %s97 = sphi 0, %s94
      %s98 = sphi 0, %s97
      %s114 = sphi 0, %s98
      %s122 = sphi 0, %s124
      %s125 = sphi 0, %s122
      %s126 = sphi 0, %s125
      %s142 = sphi 0, %s126
    $region4: #{tpu_custom_call.1} parent=1 // loop_header_branch
      %21 = sbr.rel (%p19) target = $region8
    $region5: #{tpu_custom_call.1} parent=1 // loop_body
      %s23 = ssub.s32 %s18, 1
      %s24 = ssub.s32 %s18, 2
      %s31 = sadd.s32 1, %s26
      %p32 = scmp.ge.s32.totalorder %s31, 1
      %s33 = scalar_select %p32, 0, %s31
      %s34 = sadd.s32 1, %s25
      %s35 = scalar_select %p32, %s34, %s25
      %p36 = scmp.ge.s32.totalorder %s35, 2
      %s37 = scalar_select %p36, 0, %s35
      %s38 = ssub.s32 %s25, %s37
      %p39 = scmp.eq.s32.totalorder %s38, 0
      %s41 = sadd.s32 %s40, 1
      %s42 = scalar_select %p39, %s40, %s41
      %p45 = pneg %p39
      %p46 = scmp.eq.s32.totalorder %s18, 1
      %p47 = por %p45, %p46
      %p48 = scmp.ne.s32.totalorder %s40, %s43
      %p49 = scmp.eq.s32.totalorder %s18, 0
      %p50 = por %p48, %p49
      %p51 = scmp.ne.s32.totalorder %s40, %s43
      %p52 = scmp.eq.s32.totalorder %s23, 1
      %p53 = por %p51, %p52
      %p54 = scmp.ne.s32.totalorder %s43, %s44
      %p55 = scmp.eq.s32.totalorder %s23, 0
      %p56 = por %p54, %p55
      %p57 = scmp.ne.s32.totalorder %s43, %s44
      %p58 = scmp.eq.s32.totalorder %s24, 1
      %p59 = por %p57, %p58
      %p61 = scmp.ne.s32.totalorder %s44, %s60
      %p62 = scmp.eq.s32.totalorder %s24, 0
      %p63 = por %p61, %p62
      %s64 = ssub.s32 %s25, %s37
      %p65 = scmp.eq.s32.totalorder %s64, 0
      %s67 = sadd.s32 %s66, 1
      %s68 = scalar_select %p65, %s66, %s67
      %p71 = pneg %p65
      %p72 = scmp.eq.s32.totalorder %s18, 1
      %p73 = por %p71, %p72
      %p74 = scmp.ne.s32.totalorder %s66, %s69
      %p75 = scmp.eq.s32.totalorder %s18, 0
      %p76 = por %p74, %p75
      %p77 = scmp.ne.s32.totalorder %s66, %s69
      %p78 = scmp.eq.s32.totalorder %s23, 1
      %p79 = por %p77, %p78
      %p80 = scmp.ne.s32.totalorder %s69, %s70
      %p81 = scmp.eq.s32.totalorder %s23, 0
      %p82 = por %p80, %p81
      %p83 = scmp.ne.s32.totalorder %s69, %s70
      %p84 = scmp.eq.s32.totalorder %s24, 1
      %p85 = por %p83, %p84
      %p87 = scmp.ne.s32.totalorder %s70, %s86
      %p88 = scmp.eq.s32.totalorder %s24, 0
      %p89 = por %p87, %p88
      %s90 = ssub.s32 %s25, %s37
      %s91 = ssub.s32 %s26, %s33
      %s92 = sor.u32 %s90, %s91
      %p93 = scmp.eq.s32.totalorder %s92, 0
      %s95 = sadd.s32 %s94, 1
      %s96 = scalar_select %p93, %s94, %s95
      %p99 = pneg %p93
      %p100 = scmp.eq.s32.totalorder %s18, 1
      %p101 = por %p99, %p100
      %p102 = scmp.ne.s32.totalorder %s94, %s97
      %p103 = scmp.eq.s32.totalorder %s18, 0
      %p104 = por %p102, %p103
      %p105 = scmp.ne.s32.totalorder %s94, %s97
      %p106 = scmp.eq.s32.totalorder %s23, 1
      %p107 = por %p105, %p106
      %p108 = scmp.ne.s32.totalorder %s97, %s98
      %p109 = scmp.eq.s32.totalorder %s23, 0
      %p110 = por %p108, %p109
      %p111 = scmp.ne.s32.totalorder %s97, %s98
      %p112 = scmp.eq.s32.totalorder %s24, 1
      %p113 = por %p111, %p112
      %p115 = scmp.ne.s32.totalorder %s98, %s114
      %p116 = scmp.eq.s32.totalorder %s24, 0
      %p117 = por %p115, %p116
      %s118 = ssub.s32 %s25, %s37
      %s119 = ssub.s32 %s26, %s33
      %s120 = sor.u32 %s118, %s119
      %p121 = scmp.eq.s32.totalorder %s120, 0
      %s123 = sadd.s32 %s122, 1
      %s124 = scalar_select %p121, %s122, %s123
      %p127 = pneg %p121
      %p128 = scmp.eq.s32.totalorder %s18, 1
      %p129 = por %p127, %p128
      %p130 = scmp.ne.s32.totalorder %s122, %s125
      %p131 = scmp.eq.s32.totalorder %s18, 0
      %p132 = por %p130, %p131
      %p133 = scmp.ne.s32.totalorder %s122, %s125
      %p134 = scmp.eq.s32.totalorder %s23, 1
      %p135 = por %p133, %p134
      %p136 = scmp.ne.s32.totalorder %s125, %s126
      %p137 = scmp.eq.s32.totalorder %s23, 0
      %p138 = por %p136, %p137
      %p139 = scmp.ne.s32.totalorder %s125, %s126
      %p140 = scmp.eq.s32.totalorder %s24, 1
      %p141 = por %p139, %p140
      %p143 = scmp.ne.s32.totalorder %s126, %s142
      %p144 = scmp.eq.s32.totalorder %s24, 0
      %p145 = por %p143, %p144
      %p146 = scmp.le.s32.totalorder 1, %s18
      %p147 = scmp.lt.s32.totalorder %s18, 3
      %p148 = pnand %p146, %p147
      %p149 = pneg %p148
      // Predicated region
      $region9: #{tpu_custom_call.1} parent=5 // pred_check
        _
      $region10: #{tpu_custom_call.1} parent=5 // pred_check_branch
        %151 = sbr.rel (%p148) target = $region12
      $region11: #{tpu_custom_call.1} parent=5 // pred_region
        %s152 = ssub.s32 %s18, 1
      $region12: #{tpu_custom_call.1} parent=5 // pred_fallthru
        _
      %p153 = scmp.lt.s32.totalorder %s18, 2
      // Predicated region
      $region13: #{tpu_custom_call.1} parent=5 // pred_check
        %p154 = pneg %p153
      $region14: #{tpu_custom_call.1} parent=5 // pred_check_branch
        %156 = sbr.rel (%p154) target = $region16
      $region15: #{tpu_custom_call.1} parent=5 // pred_region
        // Predicated region
        $region17: #{tpu_custom_call.1} parent=15 // pred_check
          %p157 = pneg %p50
        $region18: #{tpu_custom_call.1} parent=15 // pred_check_branch
          %159 = sbr.rel (%p157) target = $region20
        $region19: #{tpu_custom_call.1} parent=15 // pred_region
          %s160 = sand.u32 %s40, 1
          %s161 = scalar_lea.sflag [#allocation3], %s160
          %s162 = sand.u32 %s40, 1
          %s163 = smul.addr %s162, 4
          %s164 = scalar_lea.vmem [#allocation2], %s163
          %s166 = ssub.s32 64, 64
          %167 = vsyncadd %s161, %s166
          %s168 = smul.addr %s25, 64
          %s169 = scalar_lea.hbm %s0, %s168
          %s171 = sshll.u32 %s164, 4
          %s172 = int_to_ptr.vmem [resolvable:$true] %s171
          %174 = dma.hbm_to_vmem [thread:$0]  %s169, 64, %s172, %s161
        $region20: #{tpu_custom_call.1} parent=15 // pred_fallthru
          _
        // Predicated region
        $region21: #{tpu_custom_call.1} parent=15 // pred_check
          %p175 = pneg %p76
        $region22: #{tpu_custom_call.1} parent=15 // pred_check_branch
          %177 = sbr.rel (%p175) target = $region24
        $region23: #{tpu_custom_call.1} parent=15 // pred_region
          %s178 = sand.u32 %s18, 1
          %s179 = scalar_lea.sflag [#allocation6], %s178
          %s180 = sand.u32 %s66, 1
          %s181 = smul.addr %s180, 8
          %s182 = scalar_lea.vmem [#allocation5], %s181
          %s184 = ssub.s32 128, 128
          %185 = vsyncadd %s179, %s184
          %s186 = smul.addr %s25, 2
          %s187 = smul.addr %s186, 64
          %s188 = scalar_lea.hbm %s1, %s187
          %s189 = sshll.u32 %s182, 4
          %s190 = int_to_ptr.vmem [resolvable:$true] %s189
          %195 = dma.hbm_to_vmem [thread:$0]  %s188, 128, %s190, %s179, 64, 64, 4
        $region24: #{tpu_custom_call.1} parent=15 // pred_fallthru
          _
        // Predicated region
        $region25: #{tpu_custom_call.1} parent=15 // pred_check
          %p196 = pneg %p104
        $region26: #{tpu_custom_call.1} parent=15 // pred_check_branch
          %198 = sbr.rel (%p196) target = $region28
        $region27: #{tpu_custom_call.1} parent=15 // pred_region
          %s199 = sand.u32 %s18, 1
          %s200 = scalar_lea.sflag [#allocation6], %s199
          %s201 = sand.u32 %s94, 1
          %s202 = smul.addr %s201, 192
          %s203 = scalar_lea.vmem [#allocation7], %s202
          %s204 = smul.u32 3, %s26
          %s206 = ssub.s32 3072, 3072
          %207 = vsyncadd %s200, %s206
          %s208 = smul.addr %s204, 8
          %s209 = smul.addr %s25, 24
          %s210 = sadd.s32 %s208, %s209
          %s211 = smul.addr %s210, 128
          %s212 = scalar_lea.hbm %s2, %s211
          %s213 = sshll.u32 %s203, 4
          %s214 = int_to_ptr.vmem [resolvable:$true] %s213
          %219 = dma.hbm_to_vmem [thread:$0]  %s212, 3072, %s214, %s200, 128, 128, 8
        $region28: #{tpu_custom_call.1} parent=15 // pred_fallthru
          _
      $region16: #{tpu_custom_call.1} parent=5 // pred_fallthru
        _
      %p220 = scmp.le.s32.totalorder 1, %s18
      %p221 = scmp.lt.s32.totalorder %s18, 3
      %p222 = pnand %p220, %p221
      %p223 = pneg %p222
      // Predicated region
      $region29: #{tpu_custom_call.1} parent=5 // pred_check
        _
      $region30: #{tpu_custom_call.1} parent=5 // pred_check_branch
        %225 = sbr.rel (%p222) target = $region32
      $region31: #{tpu_custom_call.1} parent=5 // pred_region
        %s226 = ssub.s32 %s18, 1
        %s227 = sand.u32 %s43, 1
        %s228 = scalar_lea.sflag [#allocation3], %s227
        %s229 = sand.u32 %s43, 1
        %s230 = smul.addr %s229, 4
        %s231 = scalar_lea.vmem [#allocation2], %s230
        // Predicated region
        $region33: #{tpu_custom_call.1} parent=31 // pred_check
          %p232 = pneg %p56
        $region34: #{tpu_custom_call.1} parent=31 // pred_check_branch
          %234 = sbr.rel (%p232) target = $region36
        $region35: #{tpu_custom_call.1} parent=31 // pred_region
          %235 = dma.done %s228, 64
        $region36: #{tpu_custom_call.1} parent=31 // pred_fallthru
          _
        %s236 = sand.u32 %s23, 1
        %s237 = scalar_lea.sflag [#allocation6], %s236
        %s238 = sand.u32 %s69, 1
        %s239 = smul.addr %s238, 8
        %s240 = scalar_lea.vmem [#allocation5], %s239
        // Predicated region
        $region37: #{tpu_custom_call.1} parent=31 // pred_check
          %p241 = pneg %p82
        $region38: #{tpu_custom_call.1} parent=31 // pred_check_branch
          %243 = sbr.rel (%p241) target = $region40
        $region39: #{tpu_custom_call.1} parent=31 // pred_region
          %244 = dma.done %s237, 128
        $region40: #{tpu_custom_call.1} parent=31 // pred_fallthru
          _
        %s245 = sand.u32 %s23, 1
        %s246 = scalar_lea.sflag [#allocation6], %s245
        %s247 = sand.u32 %s97, 1
        %s248 = smul.addr %s247, 192
        %s249 = scalar_lea.vmem [#allocation7], %s248
        // Predicated region
        $region41: #{tpu_custom_call.1} parent=31 // pred_check
          %p250 = pneg %p110
        $region42: #{tpu_custom_call.1} parent=31 // pred_check_branch
          %252 = sbr.rel (%p250) target = $region44
        $region43: #{tpu_custom_call.1} parent=31 // pred_region
          %253 = dma.done %s246, 3072
        $region44: #{tpu_custom_call.1} parent=31 // pred_fallthru
          _
        %s254 = sand.u32 %s43, 1
        %s255 = scalar_lea.sflag [#allocation3], %s254
        %s256 = sand.u32 %s43, 1
        %s257 = smul.addr %s256, 4
        %s258 = scalar_lea.vmem [#allocation2], %s257
        %p259 = pneg %p56
        %p260 = pneg %p53
        %s261 = sand.u32 %s23, 1
        %s262 = scalar_lea.sflag [#allocation6], %s261
        %s263 = sand.u32 %s69, 1
        %s264 = smul.addr %s263, 8
        %s265 = scalar_lea.vmem [#allocation5], %s264
        %p266 = pneg %p82
        %p267 = pneg %p79
        %s268 = sand.u32 %s23, 1
        %s269 = scalar_lea.sflag [#allocation6], %s268
        %s270 = sand.u32 %s97, 1
        %s271 = smul.addr %s270, 192
        %s272 = scalar_lea.vmem [#allocation7], %s271
        %p273 = pneg %p110
        %p274 = pneg %p107
        %p275 = pneg %p138
        %p276 = pneg %p135
        %s277 = sand.u32 %s125, 1
        %s278 = scalar_lea.sflag [#allocation4], %s277
        %s279 = sand.u32 %s125, 1
        %s280 = smul.addr %s279, 96
        %s281 = scalar_lea.vmem [#allocation8], %s280
        %s282 = smul.u32 3, %s28
        %s283 = smul.u32 3, %s28
        %v285 = vld [vmem:[%s231] sm:$0xf]
        %v286 = vld [vmem:[%s240] sm:$0xf]
        %v287 = vld [vmem:[%s240 + $0x4] sm:$0xf]
        %v288 = vld [vmem:[%s249] sm:$0xff]
        %v289 = vld [vmem:[%s249 + $0x8] sm:$0xff]
        %v290 = vld [vmem:[%s249 + $0x10] sm:$0xff]
        %v291 = vld [vmem:[%s249 + $0x18] sm:$0xff]
        %v292 = vld [vmem:[%s249 + $0x20] sm:$0xff]
        %v293 = vld [vmem:[%s249 + $0x28] sm:$0xff]
        %v294 = vld [vmem:[%s249 + $0x30] sm:$0xff]
        %v295 = vld [vmem:[%s249 + $0x38] sm:$0xff]
        %v296 = vpack.c.bf16 %v289, %v288
        %v297 = vpack.c.bf16 %v291, %v290
        %v298 = vpack.c.bf16 %v293, %v292
        %v299 = vpack.c.bf16 %v295, %v294
        %v302 = vunpack.c.l.b16 %v286
        %v303 = vunpack.c.l.b16 %v287
        %v304 = vpack.c.b16 %v303, %v302
        %vm306 = vcmask 130048
        %v308 = vsel %vm306, %v296, 0
        %v311 = vsel %vm306, %v297, 0
        %v314 = vsel %vm306, %v298, 0
        %v317 = vsel %vm306, %v299, 0
        %319 = vmatprep.subr.bf16.mxu0 0
        %320 = vmatpush1.bf16.msra.mxu0 %v304
        %321 = vmatprep.subr.bf16.mxu0 0
        %322 = vmatpush1.bf16.msra.mxu0 0
        %323 = vmatprep.subr.bf16.mxu0 0
        %324 = vmatpush1.bf16.msra.mxu0 0
        %325 = vmatprep.subr.bf16.mxu0 0
        %326 = vmatpush1.bf16.msra.mxu0 0
        %327 = vmatprep.subr.bf16.mxu0 0
        %328 = vmatpush1.bf16.msra.mxu0 0
        %329 = vmatprep.subr.bf16.mxu0 0
        %330 = vmatpush1.bf16.msra.mxu0 0
        %331 = vmatprep.subr.bf16.mxu0 0
        %332 = vmatpush1.bf16.msra.mxu0 0
        %333 = vmatprep.subr.bf16.mxu0 0
        %334 = vmatpush1.bf16.msra.mxu0 0
        %335 = vmatprep.subr.bf16.mxu0 0
        %336 = vmatpush1.bf16.msra.mxu0 0
        %337 = vmatprep.subr.bf16.mxu0 0
        %338 = vmatpush1.bf16.msra.mxu0 0
        %339 = vmatprep.subr.bf16.mxu0 0
        %340 = vmatpush1.bf16.msra.mxu0 0
        %341 = vmatprep.subr.bf16.mxu0 0
        %342 = vmatpush1.bf16.msra.mxu0 0
        %343 = vmatprep.subr.bf16.mxu0 0
        %344 = vmatpush1.bf16.msra.mxu0 0
        %345 = vmatprep.subr.bf16.mxu0 0
        %346 = vmatpush1.bf16.msra.mxu0 0
        %347 = vmatprep.subr.bf16.mxu0 0
        %348 = vmatpush1.bf16.msra.mxu0 0
        %349 = vmatprep.subr.bf16.mxu0 0
        %350 = vmatpush1.bf16.msra.mxu0 0
        %351 = vmatprep.mubr.bf16.mxu0 0
        %352 = vmatmul.mubr.bf16.gmra.mrb[0].mxu0 %v308
        %v353 = vpop.f32.mrb[0].mxu0
        %v354 = vadd.f32 0.0, %v353
        %v355 = vpop.f32.mrb[0].mxu0
        %v356 = vpop.f32.mrb[0].mxu0
        %v357 = vadd.f32 0.0, %v356
        %v358 = vpop.f32.mrb[0].mxu0
        %359 = vmatprep.mubr.bf16.mxu0 0
        %360 = vmatmul.mubr.bf16.gmra.mrb[0].mxu0 %v311
        %v361 = vpop.f32.mrb[0].mxu0
        %v362 = vadd.f32 0.0, %v361
        %v363 = vpop.f32.mrb[0].mxu0
        %v364 = vpop.f32.mrb[0].mxu0
        %v365 = vadd.f32 0.0, %v364
        %v366 = vpop.f32.mrb[0].mxu0
        %367 = vmatprep.mubr.bf16.mxu0 0
        %368 = vmatmul.mubr.bf16.gmra.mrb[0].mxu0 %v314
        %v369 = vpop.f32.mrb[0].mxu0
        %v370 = vadd.f32 0.0, %v369
        %v371 = vpop.f32.mrb[0].mxu0
        %v372 = vpop.f32.mrb[0].mxu0
        %v373 = vadd.f32 0.0, %v372
        %v374 = vpop.f32.mrb[0].mxu0
        %375 = vmatprep.mubr.bf16.mxu0 0
        %376 = vmatmul.mubr.bf16.gmra.mrb[0].mxu0 %v317
        %v377 = vpop.f32.mrb[0].mxu0
        %v378 = vadd.f32 0.0, %v377
        %v379 = vpop.f32.mrb[0].mxu0
        %v380 = vpop.f32.mrb[0].mxu0
        %v381 = vadd.f32 0.0, %v380
        %v382 = vpop.f32.mrb[0].mxu0
        %383 = vdwg.mxu0
        %v384 = vpack.c.bf16 %v357, %v354
        %v385 = vpack.c.bf16 %v365, %v362
        %v386 = vpack.c.bf16 %v373, %v370
        %v387 = vpack.c.bf16 %v381, %v378
        %v389 = vsel %vm306, %v285, 0
        %391 = vmatprep.subr.bf16.mxu0 0
        %392 = vmatpush1.bf16.msra.mxu0 %v384
        %393 = vmatprep.subr.bf16.mxu0 0
        %394 = vmatpush1.bf16.msra.mxu0 0
        %395 = vmatprep.subr.bf16.mxu0 0
        %396 = vmatpush1.bf16.msra.mxu0 0
        %397 = vmatprep.subr.bf16.mxu0 0
        %398 = vmatpush1.bf16.msra.mxu0 0
        %399 = vmatprep.subr.bf16.mxu0 0
        %400 = vmatpush1.bf16.msra.mxu0 0
        %401 = vmatprep.subr.bf16.mxu0 0
        %402 = vmatpush1.bf16.msra.mxu0 0
        %403 = vmatprep.subr.bf16.mxu0 0
        %404 = vmatpush1.bf16.msra.mxu0 0
        %405 = vmatprep.subr.bf16.mxu0 0
        %406 = vmatpush1.bf16.msra.mxu0 0
        %407 = vmatprep.subr.bf16.mxu0 0
        %408 = vmatpush1.bf16.msra.mxu0 0
        %409 = vmatprep.subr.bf16.mxu0 0
        %410 = vmatpush1.bf16.msra.mxu0 0
        %411 = vmatprep.subr.bf16.mxu0 0
        %412 = vmatpush1.bf16.msra.mxu0 0
        %413 = vmatprep.subr.bf16.mxu0 0
        %414 = vmatpush1.bf16.msra.mxu0 0
        %415 = vmatprep.subr.bf16.mxu0 0
        %416 = vmatpush1.bf16.msra.mxu0 0
        %417 = vmatprep.subr.bf16.mxu0 0
        %418 = vmatpush1.bf16.msra.mxu0 0
        %419 = vmatprep.subr.bf16.mxu0 0
        %420 = vmatpush1.bf16.msra.mxu0 0
        %421 = vmatprep.subr.bf16.mxu0 0
        %422 = vmatpush1.bf16.msra.mxu0 0
        %423 = vmatprep.mubr.bf16.mxu0 0
        %424 = vmatmul.mubr.bf16.gmra.mrb[0].mxu0 %v389
        %v425 = vpop.f32.mrb[0].mxu0
        %v426 = vadd.f32 0.0, %v425
        %v427 = vpop.f32.mrb[0].mxu0
        %v428 = vpop.f32.mrb[0].mxu0
        %v429 = vpop.f32.mrb[0].mxu0
        %430 = vdwg.mxu0
        %vm431 = vcmask 64512
        %432 = vst.msk [vmem:[%s281] sm:$0xff] %vm431, %v426
        %433 = vmatprep.subr.bf16.mxu0 0
        %434 = vmatpush1.bf16.msra.mxu0 %v385
        %435 = vmatprep.subr.bf16.mxu0 0
        %436 = vmatpush1.bf16.msra.mxu0 0
        %437 = vmatprep.subr.bf16.mxu0 0
        %438 = vmatpush1.bf16.msra.mxu0 0
        %439 = vmatprep.subr.bf16.mxu0 0
        %440 = vmatpush1.bf16.msra.mxu0 0
        %441 = vmatprep.subr.bf16.mxu0 0
        %442 = vmatpush1.bf16.msra.mxu0 0
        %443 = vmatprep.subr.bf16.mxu0 0
        %444 = vmatpush1.bf16.msra.mxu0 0
        %445 = vmatprep.subr.bf16.mxu0 0
        %446 = vmatpush1.bf16.msra.mxu0 0
        %447 = vmatprep.subr.bf16.mxu0 0
        %448 = vmatpush1.bf16.msra.mxu0 0
        %449 = vmatprep.subr.bf16.mxu0 0
        %450 = vmatpush1.bf16.msra.mxu0 0
        %451 = vmatprep.subr.bf16.mxu0 0
        %452 = vmatpush1.bf16.msra.mxu0 0
        %453 = vmatprep.subr.bf16.mxu0 0
        %454 = vmatpush1.bf16.msra.mxu0 0
        %455 = vmatprep.subr.bf16.mxu0 0
        %456 = vmatpush1.bf16.msra.mxu0 0
        %457 = vmatprep.subr.bf16.mxu0 0
        %458 = vmatpush1.bf16.msra.mxu0 0
        %459 = vmatprep.subr.bf16.mxu0 0
        %460 = vmatpush1.bf16.msra.mxu0 0
        %461 = vmatprep.subr.bf16.mxu0 0
        %462 = vmatpush1.bf16.msra.mxu0 0
        %463 = vmatprep.subr.bf16.mxu0 0
        %464 = vmatpush1.bf16.msra.mxu0 0
        %465 = vmatprep.mubr.bf16.mxu0 0
        %466 = vmatmul.mubr.bf16.gmra.mrb[0].mxu0 %v389
        %v467 = vpop.f32.mrb[0].mxu0
        %v468 = vadd.f32 0.0, %v467
        %v469 = vpop.f32.mrb[0].mxu0
        %v470 = vpop.f32.mrb[0].mxu0
        %v471 = vpop.f32.mrb[0].mxu0
        %472 = vdwg.mxu0
        %s473 = scalar_lea.vmem %s281, 8 [#allocation8]
        %474 = vst.msk [vmem:[%s473] sm:$0xff] %vm431, %v468
        %475 = vmatprep.subr.bf16.mxu0 0
        %476 = vmatpush1.bf16.msra.mxu0 %v386
        %477 = vmatprep.subr.bf16.mxu0 0
        %478 = vmatpush1.bf16.msra.mxu0 0
        %479 = vmatprep.subr.bf16.mxu0 0
        %480 = vmatpush1.bf16.msra.mxu0 0
        %481 = vmatprep.subr.bf16.mxu0 0
        %482 = vmatpush1.bf16.msra.mxu0 0
        %483 = vmatprep.subr.bf16.mxu0 0
        %484 = vmatpush1.bf16.msra.mxu0 0
        %485 = vmatprep.subr.bf16.mxu0 0
        %486 = vmatpush1.bf16.msra.mxu0 0
        %487 = vmatprep.subr.bf16.mxu0 0
        %488 = vmatpush1.bf16.msra.mxu0 0
        %489 = vmatprep.subr.bf16.mxu0 0
        %490 = vmatpush1.bf16.msra.mxu0 0
        %491 = vmatprep.subr.bf16.mxu0 0
        %492 = vmatpush1.bf16.msra.mxu0 0
        %493 = vmatprep.subr.bf16.mxu0 0
        %494 = vmatpush1.bf16.msra.mxu0 0
        %495 = vmatprep.subr.bf16.mxu0 0
        %496 = vmatpush1.bf16.msra.mxu0 0
        %497 = vmatprep.subr.bf16.mxu0 0
        %498 = vmatpush1.bf16.msra.mxu0 0
        %499 = vmatprep.subr.bf16.mxu0 0
        %500 = vmatpush1.bf16.msra.mxu0 0
        %501 = vmatprep.subr.bf16.mxu0 0
        %502 = vmatpush1.bf16.msra.mxu0 0
        %503 = vmatprep.subr.bf16.mxu0 0
        %504 = vmatpush1.bf16.msra.mxu0 0
        %505 = vmatprep.subr.bf16.mxu0 0
        %506 = vmatpush1.bf16.msra.mxu0 0
        %507 = vmatprep.mubr.bf16.mxu0 0
        %508 = vmatmul.mubr.bf16.gmra.mrb[0].mxu0 %v389
        %v509 = vpop.f32.mrb[0].mxu0
        %v510 = vadd.f32 0.0, %v509
        %v511 = vpop.f32.mrb[0].mxu0
        %v512 = vpop.f32.mrb[0].mxu0
        %v513 = vpop.f32.mrb[0].mxu0
        %514 = vdwg.mxu0
        %s515 = scalar_lea.vmem %s281, 16 [#allocation8]
        %516 = vst.msk [vmem:[%s515] sm:$0xff] %vm431, %v510
        %517 = vmatprep.subr.bf16.mxu0 0
        %518 = vmatpush1.bf16.msra.mxu0 %v387
        %519 = vmatprep.subr.bf16.mxu0 0
        %520 = vmatpush1.bf16.msra.mxu0 0
        %521 = vmatprep.subr.bf16.mxu0 0
        %522 = vmatpush1.bf16.msra.mxu0 0
        %523 = vmatprep.subr.bf16.mxu0 0
        %524 = vmatpush1.bf16.msra.mxu0 0
        %525 = vmatprep.subr.bf16.mxu0 0
        %526 = vmatpush1.bf16.msra.mxu0 0
        %527 = vmatprep.subr.bf16.mxu0 0
        %528 = vmatpush1.bf16.msra.mxu0 0
        %529 = vmatprep.subr.bf16.mxu0 0
        %530 = vmatpush1.bf16.msra.mxu0 0
        %531 = vmatprep.subr.bf16.mxu0 0
        %532 = vmatpush1.bf16.msra.mxu0 0
        %533 = vmatprep.subr.bf16.mxu0 0
        %534 = vmatpush1.bf16.msra.mxu0 0
        %535 = vmatprep.subr.bf16.mxu0 0
        %536 = vmatpush1.bf16.msra.mxu0 0
        %537 = vmatprep.subr.bf16.mxu0 0
        %538 = vmatpush1.bf16.msra.mxu0 0
        %539 = vmatprep.subr.bf16.mxu0 0
        %540 = vmatpush1.bf16.msra.mxu0 0
        %541 = vmatprep.subr.bf16.mxu0 0
        %542 = vmatpush1.bf16.msra.mxu0 0
        %543 = vmatprep.subr.bf16.mxu0 0
        %544 = vmatpush1.bf16.msra.mxu0 0
        %545 = vmatprep.subr.bf16.mxu0 0
        %546 = vmatpush1.bf16.msra.mxu0 0
        %547 = vmatprep.subr.bf16.mxu0 0
        %548 = vmatpush1.bf16.msra.mxu0 0
        %549 = vmatprep.mubr.bf16.mxu0 0
        %550 = vmatmul.mubr.bf16.gmra.mrb[0].mxu0 %v389
        %v551 = vpop.f32.mrb[0].mxu0
        %v552 = vadd.f32 0.0, %v551
        %v553 = vpop.f32.mrb[0].mxu0
        %v554 = vpop.f32.mrb[0].mxu0
        %v555 = vpop.f32.mrb[0].mxu0
        %556 = vdwg.mxu0
        %s557 = scalar_lea.vmem %s281, 24 [#allocation8]
        %558 = vst.msk [vmem:[%s557] sm:$0xff] %vm431, %v552
        %s559 = scalar_lea.vmem %s249, 64 [#allocation7]
        %v560 = vld [vmem:[%s559] sm:$0xff]
        %v561 = vld [vmem:[%s559 + $0x8] sm:$0xff]
        %v562 = vld [vmem:[%s559 + $0x10] sm:$0xff]
        %v563 = vld [vmem:[%s559 + $0x18] sm:$0xff]
        %v564 = vld [vmem:[%s559 + $0x20] sm:$0xff]
        %v565 = vld [vmem:[%s559 + $0x28] sm:$0xff]
        %v566 = vld [vmem:[%s559 + $0x30] sm:$0xff]
        %v567 = vld [vmem:[%s559 + $0x38] sm:$0xff]
        %v568 = vpack.c.bf16 %v561, %v560
        %v569 = vpack.c.bf16 %v563, %v562
        %v570 = vpack.c.bf16 %v565, %v564
        %v571 = vpack.c.bf16 %v567, %v566
        %v573 = vsel %vm306, %v568, 0
        %v576 = vsel %vm306, %v569, 0
        %v579 = vsel %vm306, %v570, 0
        %v582 = vsel %vm306, %v571, 0
        %584 = vmatprep.subr.bf16.mxu0 0
        %585 = vmatpush1.bf16.msra.mxu0 %v304
        %586 = vmatprep.subr.bf16.mxu0 0
        %587 = vmatpush1.bf16.msra.mxu0 0
        %588 = vmatprep.subr.bf16.mxu0 0
        %589 = vmatpush1.bf16.msra.mxu0 0
        %590 = vmatprep.subr.bf16.mxu0 0
        %591 = vmatpush1.bf16.msra.mxu0 0
        %592 = vmatprep.subr.bf16.mxu0 0
        %593 = vmatpush1.bf16.msra.mxu0 0
        %594 = vmatprep.subr.bf16.mxu0 0
        %595 = vmatpush1.bf16.msra.mxu0 0
        %596 = vmatprep.subr.bf16.mxu0 0
        %597 = vmatpush1.bf16.msra.mxu0 0
        %598 = vmatprep.subr.bf16.mxu0 0
        %599 = vmatpush1.bf16.msra.mxu0 0
        %600 = vmatprep.subr.bf16.mxu0 0
        %601 = vmatpush1.bf16.msra.mxu0 0
        %602 = vmatprep.subr.bf16.mxu0 0
        %603 = vmatpush1.bf16.msra.mxu0 0
        %604 = vmatprep.subr.bf16.mxu0 0
        %605 = vmatpush1.bf16.msra.mxu0 0
        %606 = vmatprep.subr.bf16.mxu0 0
        %607 = vmatpush1.bf16.msra.mxu0 0
        %608 = vmatprep.subr.bf16.mxu0 0
        %609 = vmatpush1.bf16.msra.mxu0 0
        %610 = vmatprep.subr.bf16.mxu0 0
        %611 = vmatpush1.bf16.msra.mxu0 0
        %612 = vmatprep.subr.bf16.mxu0 0
        %613 = vmatpush1.bf16.msra.mxu0 0
        %614 = vmatprep.subr.bf16.mxu0 0
        %615 = vmatpush1.bf16.msra.mxu0 0
        %616 = vmatprep.mubr.bf16.mxu0 0
        %617 = vmatmul.mubr.bf16.gmra.mrb[0].mxu0 %v573
        %v618 = vpop.f32.mrb[0].mxu0
        %v619 = vadd.f32 0.0, %v618
        %v620 = vpop.f32.mrb[0].mxu0
        %v621 = vpop.f32.mrb[0].mxu0
        %v622 = vadd.f32 0.0, %v621
        %v623 = vpop.f32.mrb[0].mxu0
        %624 = vmatprep.mubr.bf16.mxu0 0
        %625 = vmatmul.mubr.bf16.gmra.mrb[0].mxu0 %v576
        %v626 = vpop.f32.mrb[0].mxu0
        %v627 = vadd.f32 0.0, %v626
        %v628 = vpop.f32.mrb[0].mxu0
        %v629 = vpop.f32.mrb[0].mxu0
        %v630 = vadd.f32 0.0, %v629
        %v631 = vpop.f32.mrb[0].mxu0
        %632 = vmatprep.mubr.bf16.mxu0 0
        %633 = vmatmul.mubr.bf16.gmra.mrb[0].mxu0 %v579
        %v634 = vpop.f32.mrb[0].mxu0
        %v635 = vadd.f32 0.0, %v634
        %v636 = vpop.f32.mrb[0].mxu0
        %v637 = vpop.f32.mrb[0].mxu0
        %v638 = vadd.f32 0.0, %v637
        %v639 = vpop.f32.mrb[0].mxu0
        %640 = vmatprep.mubr.bf16.mxu0 0
        %641 = vmatmul.mubr.bf16.gmra.mrb[0].mxu0 %v582
        %v642 = vpop.f32.mrb[0].mxu0
        %v643 = vadd.f32 0.0, %v642
        %v644 = vpop.f32.mrb[0].mxu0
        %v645 = vpop.f32.mrb[0].mxu0
        %v646 = vadd.f32 0.0, %v645
        %v647 = vpop.f32.mrb[0].mxu0
        %648 = vdwg.mxu0
        %v649 = vpack.c.bf16 %v622, %v619
        %v650 = vpack.c.bf16 %v630, %v627
        %v651 = vpack.c.bf16 %v638, %v635
        %v652 = vpack.c.bf16 %v646, %v643
        %653 = vmatprep.subr.bf16.mxu0 0
        %654 = vmatpush1.bf16.msra.mxu0 %v649
        %655 = vmatprep.subr.bf16.mxu0 0
        %656 = vmatpush1.bf16.msra.mxu0 0
        %657 = vmatprep.subr.bf16.mxu0 0
        %658 = vmatpush1.bf16.msra.mxu0 0
        %659 = vmatprep.subr.bf16.mxu0 0
        %660 = vmatpush1.bf16.msra.mxu0 0
        %661 = vmatprep.subr.bf16.mxu0 0
        %662 = vmatpush1.bf16.msra.mxu0 0
        %663 = vmatprep.subr.bf16.mxu0 0
        %664 = vmatpush1.bf16.msra.mxu0 0
        %665 = vmatprep.subr.bf16.mxu0 0
        %666 = vmatpush1.bf16.msra.mxu0 0
        %667 = vmatprep.subr.bf16.mxu0 0
        %668 = vmatpush1.bf16.msra.mxu0 0
        %669 = vmatprep.subr.bf16.mxu0 0
        %670 = vmatpush1.bf16.msra.mxu0 0
        %671 = vmatprep.subr.bf16.mxu0 0
        %672 = vmatpush1.bf16.msra.mxu0 0
        %673 = vmatprep.subr.bf16.mxu0 0
        %674 = vmatpush1.bf16.msra.mxu0 0
        %675 = vmatprep.subr.bf16.mxu0 0
        %676 = vmatpush1.bf16.msra.mxu0 0
        %677 = vmatprep.subr.bf16.mxu0 0
        %678 = vmatpush1.bf16.msra.mxu0 0
        %679 = vmatprep.subr.bf16.mxu0 0
        %680 = vmatpush1.bf16.msra.mxu0 0
        %681 = vmatprep.subr.bf16.mxu0 0
        %682 = vmatpush1.bf16.msra.mxu0 0
        %683 = vmatprep.subr.bf16.mxu0 0
        %684 = vmatpush1.bf16.msra.mxu0 0
        %685 = vmatprep.mubr.bf16.mxu0 0
        %686 = vmatmul.mubr.bf16.gmra.mrb[0].mxu0 %v389
        %v687 = vpop.f32.mrb[0].mxu0
        %v688 = vadd.f32 0.0, %v687
        %v689 = vpop.f32.mrb[0].mxu0
        %v690 = vpop.f32.mrb[0].mxu0
        %v691 = vpop.f32.mrb[0].mxu0
        %692 = vdwg.mxu0
        %s693 = scalar_lea.vmem %s281, 32 [#allocation8]
        %694 = vst.msk [vmem:[%s693] sm:$0xff] %vm431, %v688
        %695 = vmatprep.subr.bf16.mxu0 0
        %696 = vmatpush1.bf16.msra.mxu0 %v650
        %697 = vmatprep.subr.bf16.mxu0 0
        %698 = vmatpush1.bf16.msra.mxu0 0
        %699 = vmatprep.subr.bf16.mxu0 0
        %700 = vmatpush1.bf16.msra.mxu0 0
        %701 = vmatprep.subr.bf16.mxu0 0
        %702 = vmatpush1.bf16.msra.mxu0 0
        %703 = vmatprep.subr.bf16.mxu0 0
        %704 = vmatpush1.bf16.msra.mxu0 0
        %705 = vmatprep.subr.bf16.mxu0 0
        %706 = vmatpush1.bf16.msra.mxu0 0
        %707 = vmatprep.subr.bf16.mxu0 0
        %708 = vmatpush1.bf16.msra.mxu0 0
        %709 = vmatprep.subr.bf16.mxu0 0
        %710 = vmatpush1.bf16.msra.mxu0 0
        %711 = vmatprep.subr.bf16.mxu0 0
        %712 = vmatpush1.bf16.msra.mxu0 0
        %713 = vmatprep.subr.bf16.mxu0 0
        %714 = vmatpush1.bf16.msra.mxu0 0
        %715 = vmatprep.subr.bf16.mxu0 0
        %716 = vmatpush1.bf16.msra.mxu0 0
        %717 = vmatprep.subr.bf16.mxu0 0
        %718 = vmatpush1.bf16.msra.mxu0 0
        %719 = vmatprep.subr.bf16.mxu0 0
        %720 = vmatpush1.bf16.msra.mxu0 0
        %721 = vmatprep.subr.bf16.mxu0 0
        %722 = vmatpush1.bf16.msra.mxu0 0
        %723 = vmatprep.subr.bf16.mxu0 0
        %724 = vmatpush1.bf16.msra.mxu0 0
        %725 = vmatprep.subr.bf16.mxu0 0
        %726 = vmatpush1.bf16.msra.mxu0 0
        %727 = vmatprep.mubr.bf16.mxu0 0
        %728 = vmatmul.mubr.bf16.gmra.mrb[0].mxu0 %v389
        %v729 = vpop.f32.mrb[0].mxu0
        %v730 = vadd.f32 0.0, %v729
        %v731 = vpop.f32.mrb[0].mxu0
        %v732 = vpop.f32.mrb[0].mxu0
        %v733 = vpop.f32.mrb[0].mxu0
        %734 = vdwg.mxu0
        %s735 = scalar_lea.vmem %s281, 40 [#allocation8]
        %736 = vst.msk [vmem:[%s735] sm:$0xff] %vm431, %v730
        %737 = vmatprep.subr.bf16.mxu0 0
        %738 = vmatpush1.bf16.msra.mxu0 %v651
        %739 = vmatprep.subr.bf16.mxu0 0
        %740 = vmatpush1.bf16.msra.mxu0 0
        %741 = vmatprep.subr.bf16.mxu0 0
        %742 = vmatpush1.bf16.msra.mxu0 0
        %743 = vmatprep.subr.bf16.mxu0 0
        %744 = vmatpush1.bf16.msra.mxu0 0
        %745 = vmatprep.subr.bf16.mxu0 0
        %746 = vmatpush1.bf16.msra.mxu0 0
        %747 = vmatprep.subr.bf16.mxu0 0
        %748 = vmatpush1.bf16.msra.mxu0 0
        %749 = vmatprep.subr.bf16.mxu0 0
        %750 = vmatpush1.bf16.msra.mxu0 0
        %751 = vmatprep.subr.bf16.mxu0 0
        %752 = vmatpush1.bf16.msra.mxu0 0
        %753 = vmatprep.subr.bf16.mxu0 0
        %754 = vmatpush1.bf16.msra.mxu0 0
        %755 = vmatprep.subr.bf16.mxu0 0
        %756 = vmatpush1.bf16.msra.mxu0 0
        %757 = vmatprep.subr.bf16.mxu0 0
        %758 = vmatpush1.bf16.msra.mxu0 0
        %759 = vmatprep.subr.bf16.mxu0 0
        %760 = vmatpush1.bf16.msra.mxu0 0
        %761 = vmatprep.subr.bf16.mxu0 0
        %762 = vmatpush1.bf16.msra.mxu0 0
        %763 = vmatprep.subr.bf16.mxu0 0
        %764 = vmatpush1.bf16.msra.mxu0 0
        %765 = vmatprep.subr.bf16.mxu0 0
        %766 = vmatpush1.bf16.msra.mxu0 0
        %767 = vmatprep.subr.bf16.mxu0 0
        %768 = vmatpush1.bf16.msra.mxu0 0
        %769 = vmatprep.mubr.bf16.mxu0 0
        %770 = vmatmul.mubr.bf16.gmra.mrb[0].mxu0 %v389
        %v771 = vpop.f32.mrb[0].mxu0
        %v772 = vadd.f32 0.0, %v771
        %v773 = vpop.f32.mrb[0].mxu0
        %v774 = vpop.f32.mrb[0].mxu0
        %v775 = vpop.f32.mrb[0].mxu0
        %776 = vdwg.mxu0
        %s777 = scalar_lea.vmem %s281, 48 [#allocation8]
        %778 = vst.msk [vmem:[%s777] sm:$0xff] %vm431, %v772
        %779 = vmatprep.subr.bf16.mxu0 0
        %780 = vmatpush1.bf16.msra.mxu0 %v652
        %781 = vmatprep.subr.bf16.mxu0 0
        %782 = vmatpush1.bf16.msra.mxu0 0
        %783 = vmatprep.subr.bf16.mxu0 0
        %784 = vmatpush1.bf16.msra.mxu0 0
        %785 = vmatprep.subr.bf16.mxu0 0
        %786 = vmatpush1.bf16.msra.mxu0 0
        %787 = vmatprep.subr.bf16.mxu0 0
        %788 = vmatpush1.bf16.msra.mxu0 0
        %789 = vmatprep.subr.bf16.mxu0 0
        %790 = vmatpush1.bf16.msra.mxu0 0
        %791 = vmatprep.subr.bf16.mxu0 0
        %792 = vmatpush1.bf16.msra.mxu0 0
        %793 = vmatprep.subr.bf16.mxu0 0
        %794 = vmatpush1.bf16.msra.mxu0 0
        %795 = vmatprep.subr.bf16.mxu0 0
        %796 = vmatpush1.bf16.msra.mxu0 0
        %797 = vmatprep.subr.bf16.mxu0 0
        %798 = vmatpush1.bf16.msra.mxu0 0
        %799 = vmatprep.subr.bf16.mxu0 0
        %800 = vmatpush1.bf16.msra.mxu0 0
        %801 = vmatprep.subr.bf16.mxu0 0
        %802 = vmatpush1.bf16.msra.mxu0 0
        %803 = vmatprep.subr.bf16.mxu0 0
        %804 = vmatpush1.bf16.msra.mxu0 0
        %805 = vmatprep.subr.bf16.mxu0 0
        %806 = vmatpush1.bf16.msra.mxu0 0
        %807 = vmatprep.subr.bf16.mxu0 0
        %808 = vmatpush1.bf16.msra.mxu0 0
        %809 = vmatprep.subr.bf16.mxu0 0
        %810 = vmatpush1.bf16.msra.mxu0 0
        %811 = vmatprep.mubr.bf16.mxu0 0
        %812 = vmatmul.mubr.bf16.gmra.mrb[0].mxu0 %v389
        %v813 = vpop.f32.mrb[0].mxu0
        %v814 = vadd.f32 0.0, %v813
        %v815 = vpop.f32.mrb[0].mxu0
        %v816 = vpop.f32.mrb[0].mxu0
        %v817 = vpop.f32.mrb[0].mxu0
        %818 = vdwg.mxu0
        %s819 = scalar_lea.vmem %s281, 56 [#allocation8]
        %820 = vst.msk [vmem:[%s819] sm:$0xff] %vm431, %v814
        %s821 = scalar_lea.vmem %s249, 128 [#allocation7]
        %v822 = vld [vmem:[%s821] sm:$0xff]
        %v823 = vld [vmem:[%s821 + $0x8] sm:$0xff]
        %v824 = vld [vmem:[%s821 + $0x10] sm:$0xff]
        %v825 = vld [vmem:[%s821 + $0x18] sm:$0xff]
        %v826 = vld [vmem:[%s821 + $0x20] sm:$0xff]
        %v827 = vld [vmem:[%s821 + $0x28] sm:$0xff]
        %v828 = vld [vmem:[%s821 + $0x30] sm:$0xff]
        %v829 = vld [vmem:[%s821 + $0x38] sm:$0xff]
        %v830 = vpack.c.bf16 %v823, %v822
        %v831 = vpack.c.bf16 %v825, %v824
        %v832 = vpack.c.bf16 %v827, %v826
        %v833 = vpack.c.bf16 %v829, %v828
        %v835 = vsel %vm306, %v830, 0
        %v838 = vsel %vm306, %v831, 0
        %v841 = vsel %vm306, %v832, 0
        %v844 = vsel %vm306, %v833, 0
        %846 = vmatprep.subr.bf16.mxu0 0
        %847 = vmatpush1.bf16.msra.mxu0 %v304
        %848 = vmatprep.subr.bf16.mxu0 0
        %849 = vmatpush1.bf16.msra.mxu0 0
        %850 = vmatprep.subr.bf16.mxu0 0
        %851 = vmatpush1.bf16.msra.mxu0 0
        %852 = vmatprep.subr.bf16.mxu0 0
        %853 = vmatpush1.bf16.msra.mxu0 0
        %854 = vmatprep.subr.bf16.mxu0 0
        %855 = vmatpush1.bf16.msra.mxu0 0
        %856 = vmatprep.subr.bf16.mxu0 0
        %857 = vmatpush1.bf16.msra.mxu0 0
        %858 = vmatprep.subr.bf16.mxu0 0
        %859 = vmatpush1.bf16.msra.mxu0 0
        %860 = vmatprep.subr.bf16.mxu0 0
        %861 = vmatpush1.bf16.msra.mxu0 0
        %862 = vmatprep.subr.bf16.mxu0 0
        %863 = vmatpush1.bf16.msra.mxu0 0
        %864 = vmatprep.subr.bf16.mxu0 0
        %865 = vmatpush1.bf16.msra.mxu0 0
        %866 = vmatprep.subr.bf16.mxu0 0
        %867 = vmatpush1.bf16.msra.mxu0 0
        %868 = vmatprep.subr.bf16.mxu0 0
        %869 = vmatpush1.bf16.msra.mxu0 0
        %870 = vmatprep.subr.bf16.mxu0 0
        %871 = vmatpush1.bf16.msra.mxu0 0
        %872 = vmatprep.subr.bf16.mxu0 0
        %873 = vmatpush1.bf16.msra.mxu0 0
        %874 = vmatprep.subr.bf16.mxu0 0
        %875 = vmatpush1.bf16.msra.mxu0 0
        %876 = vmatprep.subr.bf16.mxu0 0
        %877 = vmatpush1.bf16.msra.mxu0 0
        %878 = vmatprep.mubr.bf16.mxu0 0
        %879 = vmatmul.mubr.bf16.gmra.mrb[0].mxu0 %v835
        %v880 = vpop.f32.mrb[0].mxu0
        %v881 = vadd.f32 0.0, %v880
        %v882 = vpop.f32.mrb[0].mxu0
        %v883 = vpop.f32.mrb[0].mxu0
        %v884 = vadd.f32 0.0, %v883
        %v885 = vpop.f32.mrb[0].mxu0
        %886 = vmatprep.mubr.bf16.mxu0 0
        %887 = vmatmul.mubr.bf16.gmra.mrb[0].mxu0 %v838
        %v888 = vpop.f32.mrb[0].mxu0
        %v889 = vadd.f32 0.0, %v888
        %v890 = vpop.f32.mrb[0].mxu0
        %v891 = vpop.f32.mrb[0].mxu0
        %v892 = vadd.f32 0.0, %v891
        %v893 = vpop.f32.mrb[0].mxu0
        %894 = vmatprep.mubr.bf16.mxu0 0
        %895 = vmatmul.mubr.bf16.gmra.mrb[0].mxu0 %v841
        %v896 = vpop.f32.mrb[0].mxu0
        %v897 = vadd.f32 0.0, %v896
        %v898 = vpop.f32.mrb[0].mxu0
        %v899 = vpop.f32.mrb[0].mxu0
        %v900 = vadd.f32 0.0, %v899
        %v901 = vpop.f32.mrb[0].mxu0
        %902 = vmatprep.mubr.bf16.mxu0 0
        %903 = vmatmul.mubr.bf16.gmra.mrb[0].mxu0 %v844
        %v904 = vpop.f32.mrb[0].mxu0
        %v905 = vadd.f32 0.0, %v904
        %v906 = vpop.f32.mrb[0].mxu0
        %v907 = vpop.f32.mrb[0].mxu0
        %v908 = vadd.f32 0.0, %v907
        %v909 = vpop.f32.mrb[0].mxu0
        %910 = vdwg.mxu0
        %v911 = vpack.c.bf16 %v884, %v881
        %v912 = vpack.c.bf16 %v892, %v889
        %v913 = vpack.c.bf16 %v900, %v897
        %v914 = vpack.c.bf16 %v908, %v905
        %915 = vmatprep.subr.bf16.mxu0 0
        %916 = vmatpush1.bf16.msra.mxu0 %v911
        %917 = vmatprep.subr.bf16.mxu0 0
        %918 = vmatpush1.bf16.msra.mxu0 0
        %919 = vmatprep.subr.bf16.mxu0 0
        %920 = vmatpush1.bf16.msra.mxu0 0
        %921 = vmatprep.subr.bf16.mxu0 0
        %922 = vmatpush1.bf16.msra.mxu0 0
        %923 = vmatprep.subr.bf16.mxu0 0
        %924 = vmatpush1.bf16.msra.mxu0 0
        %925 = vmatprep.subr.bf16.mxu0 0
        %926 = vmatpush1.bf16.msra.mxu0 0
        %927 = vmatprep.subr.bf16.mxu0 0
        %928 = vmatpush1.bf16.msra.mxu0 0
        %929 = vmatprep.subr.bf16.mxu0 0
        %930 = vmatpush1.bf16.msra.mxu0 0
        %931 = vmatprep.subr.bf16.mxu0 0
        %932 = vmatpush1.bf16.msra.mxu0 0
        %933 = vmatprep.subr.bf16.mxu0 0
        %934 = vmatpush1.bf16.msra.mxu0 0
        %935 = vmatprep.subr.bf16.mxu0 0
        %936 = vmatpush1.bf16.msra.mxu0 0
        %937 = vmatprep.subr.bf16.mxu0 0
        %938 = vmatpush1.bf16.msra.mxu0 0
        %939 = vmatprep.subr.bf16.mxu0 0
        %940 = vmatpush1.bf16.msra.mxu0 0
        %941 = vmatprep.subr.bf16.mxu0 0
        %942 = vmatpush1.bf16.msra.mxu0 0
        %943 = vmatprep.subr.bf16.mxu0 0
        %944 = vmatpush1.bf16.msra.mxu0 0
        %945 = vmatprep.subr.bf16.mxu0 0
        %946 = vmatpush1.bf16.msra.mxu0 0
        %947 = vmatprep.mubr.bf16.mxu0 0
        %948 = vmatmul.mubr.bf16.gmra.mrb[0].mxu0 %v389
        %v949 = vpop.f32.mrb[0].mxu0
        %v950 = vadd.f32 0.0, %v949
        %v951 = vpop.f32.mrb[0].mxu0
        %v952 = vpop.f32.mrb[0].mxu0
        %v953 = vpop.f32.mrb[0].mxu0
        %954 = vdwg.mxu0
        %s955 = scalar_lea.vmem %s281, 64 [#allocation8]
        %956 = vst.msk [vmem:[%s955] sm:$0xff] %vm431, %v950
        %957 = vmatprep.subr.bf16.mxu0 0
        %958 = vmatpush1.bf16.msra.mxu0 %v912
        %959 = vmatprep.subr.bf16.mxu0 0
        %960 = vmatpush1.bf16.msra.mxu0 0
        %961 = vmatprep.subr.bf16.mxu0 0
        %962 = vmatpush1.bf16.msra.mxu0 0
        %963 = vmatprep.subr.bf16.mxu0 0
        %964 = vmatpush1.bf16.msra.mxu0 0
        %965 = vmatprep.subr.bf16.mxu0 0
        %966 = vmatpush1.bf16.msra.mxu0 0
        %967 = vmatprep.subr.bf16.mxu0 0
        %968 = vmatpush1.bf16.msra.mxu0 0
        %969 = vmatprep.subr.bf16.mxu0 0
        %970 = vmatpush1.bf16.msra.mxu0 0
        %971 = vmatprep.subr.bf16.mxu0 0
        %972 = vmatpush1.bf16.msra.mxu0 0
        %973 = vmatprep.subr.bf16.mxu0 0
        %974 = vmatpush1.bf16.msra.mxu0 0
        %975 = vmatprep.subr.bf16.mxu0 0
        %976 = vmatpush1.bf16.msra.mxu0 0
        %977 = vmatprep.subr.bf16.mxu0 0
        %978 = vmatpush1.bf16.msra.mxu0 0
        %979 = vmatprep.subr.bf16.mxu0 0
        %980 = vmatpush1.bf16.msra.mxu0 0
        %981 = vmatprep.subr.bf16.mxu0 0
        %982 = vmatpush1.bf16.msra.mxu0 0
        %983 = vmatprep.subr.bf16.mxu0 0
        %984 = vmatpush1.bf16.msra.mxu0 0
        %985 = vmatprep.subr.bf16.mxu0 0
        %986 = vmatpush1.bf16.msra.mxu0 0
        %987 = vmatprep.subr.bf16.mxu0 0
        %988 = vmatpush1.bf16.msra.mxu0 0
        %989 = vmatprep.mubr.bf16.mxu0 0
        %990 = vmatmul.mubr.bf16.gmra.mrb[0].mxu0 %v389
        %v991 = vpop.f32.mrb[0].mxu0
        %v992 = vadd.f32 0.0, %v991
        %v993 = vpop.f32.mrb[0].mxu0
        %v994 = vpop.f32.mrb[0].mxu0
        %v995 = vpop.f32.mrb[0].mxu0
        %996 = vdwg.mxu0
        %s997 = scalar_lea.vmem %s281, 72 [#allocation8]
        %998 = vst.msk [vmem:[%s997] sm:$0xff] %vm431, %v992
        %999 = vmatprep.subr.bf16.mxu0 0
        %1000 = vmatpush1.bf16.msra.mxu0 %v913
        %1001 = vmatprep.subr.bf16.mxu0 0
        %1002 = vmatpush1.bf16.msra.mxu0 0
        %1003 = vmatprep.subr.bf16.mxu0 0
        %1004 = vmatpush1.bf16.msra.mxu0 0
        %1005 = vmatprep.subr.bf16.mxu0 0
        %1006 = vmatpush1.bf16.msra.mxu0 0
        %1007 = vmatprep.subr.bf16.mxu0 0
        %1008 = vmatpush1.bf16.msra.mxu0 0
        %1009 = vmatprep.subr.bf16.mxu0 0
        %1010 = vmatpush1.bf16.msra.mxu0 0
        %1011 = vmatprep.subr.bf16.mxu0 0
        %1012 = vmatpush1.bf16.msra.mxu0 0
        %1013 = vmatprep.subr.bf16.mxu0 0
        %1014 = vmatpush1.bf16.msra.mxu0 0
        %1015 = vmatprep.subr.bf16.mxu0 0
        %1016 = vmatpush1.bf16.msra.mxu0 0
        %1017 = vmatprep.subr.bf16.mxu0 0
        %1018 = vmatpush1.bf16.msra.mxu0 0
        %1019 = vmatprep.subr.bf16.mxu0 0
        %1020 = vmatpush1.bf16.msra.mxu0 0
        %1021 = vmatprep.subr.bf16.mxu0 0
        %1022 = vmatpush1.bf16.msra.mxu0 0
        %1023 = vmatprep.subr.bf16.mxu0 0
        %1024 = vmatpush1.bf16.msra.mxu0 0
        %1025 = vmatprep.subr.bf16.mxu0 0
        %1026 = vmatpush1.bf16.msra.mxu0 0
        %1027 = vmatprep.subr.bf16.mxu0 0
        %1028 = vmatpush1.bf16.msra.mxu0 0
        %1029 = vmatprep.subr.bf16.mxu0 0
        %1030 = vmatpush1.bf16.msra.mxu0 0
        %1031 = vmatprep.mubr.bf16.mxu0 0
        %1032 = vmatmul.mubr.bf16.gmra.mrb[0].mxu0 %v389
        %v1033 = vpop.f32.mrb[0].mxu0
        %v1034 = vadd.f32 0.0, %v1033
        %v1035 = vpop.f32.mrb[0].mxu0
        %v1036 = vpop.f32.mrb[0].mxu0
        %v1037 = vpop.f32.mrb[0].mxu0
        %1038 = vdwg.mxu0
        %s1039 = scalar_lea.vmem %s281, 80 [#allocation8]
        %1040 = vst.msk [vmem:[%s1039] sm:$0xff] %vm431, %v1034
        %1041 = vmatprep.subr.bf16.mxu0 0
        %1042 = vmatpush1.bf16.msra.mxu0 %v914
        %1043 = vmatprep.subr.bf16.mxu0 0
        %1044 = vmatpush1.bf16.msra.mxu0 0
        %1045 = vmatprep.subr.bf16.mxu0 0
        %1046 = vmatpush1.bf16.msra.mxu0 0
        %1047 = vmatprep.subr.bf16.mxu0 0
        %1048 = vmatpush1.bf16.msra.mxu0 0
        %1049 = vmatprep.subr.bf16.mxu0 0
        %1050 = vmatpush1.bf16.msra.mxu0 0
        %1051 = vmatprep.subr.bf16.mxu0 0
        %1052 = vmatpush1.bf16.msra.mxu0 0
        %1053 = vmatprep.subr.bf16.mxu0 0
        %1054 = vmatpush1.bf16.msra.mxu0 0
        %1055 = vmatprep.subr.bf16.mxu0 0
        %1056 = vmatpush1.bf16.msra.mxu0 0
        %1057 = vmatprep.subr.bf16.mxu0 0
        %1058 = vmatpush1.bf16.msra.mxu0 0
        %1059 = vmatprep.subr.bf16.mxu0 0
        %1060 = vmatpush1.bf16.msra.mxu0 0
        %1061 = vmatprep.subr.bf16.mxu0 0
        %1062 = vmatpush1.bf16.msra.mxu0 0
        %1063 = vmatprep.subr.bf16.mxu0 0
        %1064 = vmatpush1.bf16.msra.mxu0 0
        %1065 = vmatprep.subr.bf16.mxu0 0
        %1066 = vmatpush1.bf16.msra.mxu0 0
        %1067 = vmatprep.subr.bf16.mxu0 0
        %1068 = vmatpush1.bf16.msra.mxu0 0
        %1069 = vmatprep.subr.bf16.mxu0 0
        %1070 = vmatpush1.bf16.msra.mxu0 0
        %1071 = vmatprep.subr.bf16.mxu0 0
        %1072 = vmatpush1.bf16.msra.mxu0 0
        %1073 = vmatprep.mubr.bf16.mxu0 0
        %1074 = vmatmul.mubr.bf16.gmra.mrb[0].mxu0 %v389
        %v1075 = vpop.f32.mrb[0].mxu0
        %v1076 = vadd.f32 0.0, %v1075
        %v1077 = vpop.f32.mrb[0].mxu0
        %v1078 = vpop.f32.mrb[0].mxu0
        %v1079 = vpop.f32.mrb[0].mxu0
        %1080 = vdwg.mxu0
        %s1081 = scalar_lea.vmem %s281, 88 [#allocation8]
        %1082 = vst.msk [vmem:[%s1081] sm:$0xff] %vm431, %v1076
        %s1083 = sand.u32 %s125, 1
        %s1084 = scalar_lea.sflag [#allocation4], %s1083
        %s1085 = sand.u32 %s125, 1
        %s1086 = smul.addr %s1085, 96
        %s1087 = scalar_lea.vmem [#allocation8], %s1086
        // Predicated region
        $region45: #{tpu_custom_call.1} parent=31 // pred_check
          %p1088 = pneg %p135
        $region46: #{tpu_custom_call.1} parent=31 // pred_check_branch
          %1090 = sbr.rel (%p1088) target = $region48
        $region47: #{tpu_custom_call.1} parent=31 // pred_region
          %s1091 = smul.u32 3, %s28
          %s1093 = ssub.s32 1536, 1536
          %1094 = vsyncadd %s1084, %s1093
          %s1095 = smul.addr %s1091, 4
          %s1096 = smul.addr %s27, 12
          %s1097 = sadd.s32 %s1095, %s1096
          %s1098 = smul.addr %s1097, 128
          %s1099 = scalar_lea.hbm %s3, %s1098
          %s1100 = sshll.u32 %s1087, 4
          %s1101 = int_to_ptr.vmem [resolvable:$true] %s1100
          %1106 = dma.vmem_to_hbm [thread:$0]  %s1101, 1536, %s1099, %s1084, 128, 128, 8
        $region48: #{tpu_custom_call.1} parent=31 // pred_fallthru
          _
      $region32: #{tpu_custom_call.1} parent=5 // pred_fallthru
        _
      %p1107 = scmp.le.s32.totalorder 2, %s18
      // Predicated region
      $region49: #{tpu_custom_call.1} parent=5 // pred_check
        %p1108 = pneg %p1107
      $region50: #{tpu_custom_call.1} parent=5 // pred_check_branch
        %1110 = sbr.rel (%p1108) target = $region52
      $region51: #{tpu_custom_call.1} parent=5 // pred_region
        %s1111 = ssub.s32 %s18, 2
        // Predicated region
        $region53: #{tpu_custom_call.1} parent=51 // pred_check
          %p1112 = pneg %p141
        $region54: #{tpu_custom_call.1} parent=51 // pred_check_branch
          %1114 = sbr.rel (%p1112) target = $region56
        $region55: #{tpu_custom_call.1} parent=51 // pred_region
          %s1115 = sand.u32 %s126, 1
          %s1116 = scalar_lea.sflag [#allocation4], %s1115
          %s1117 = sand.u32 %s126, 1
          %s1118 = smul.addr %s1117, 96
          %s1119 = scalar_lea.vmem [#allocation8], %s1118
          %1120 = dma.done %s1116, 1536
        $region56: #{tpu_custom_call.1} parent=51 // pred_fallthru
          _
      $region52: #{tpu_custom_call.1} parent=5 // pred_fallthru
        _
    $region6: #{tpu_custom_call.1} parent=1 // loop_footer
      %s22 = sadd.s32 1, %s18
    $region7: #{tpu_custom_call.1} parent=1 // loop_footer_branch
      %17 = sbr.rel target = $region3
    $region8: #{tpu_custom_call.1} parent=1 // loop_exit
      _
    %1121 = vsyncpa [#allocation3], 1
    %s1122 = scalar_lea.sflag [#allocation3], 1
    %1123 = vsyncpa %s1122, 1
    %1124 = vsyncpa [#allocation6], 1
    %s1125 = scalar_lea.sflag [#allocation6], 1
    %1126 = vsyncpa %s1125, 1
    %1127 = vsyncpa [#allocation4], 1
    %s1128 = scalar_lea.sflag [#allocation4], 1
    %1129 = vsyncpa %s1128, 1

</llo_original>
